<compile_context>
chip_gen: v7x
topology: tpu7x:2x2x1
jax: 0.10.0
libtpu: 0.0.40
codegen_flags: <defaults>
</compile_context>

<pallas_src>
import functools

import jax
import jax.numpy as jnp
from jax.experimental import pallas as pl
from jax.experimental.pallas import tpu as pltpu


def _lstm_fused_kernel(x_ref, mask_ref, wih_ref, whh_ref, b_ref,
                       wout_ref, bout_ref, out_ref,
                       *, seq_len, batch_pad, hidden_dim):
    T, Bp, H = seq_len, batch_pad, hidden_dim

    # ---- 1) Input projection for ALL timesteps: one MXU matmul -------------
    # x_ref is (T*Bp, E) time-major; gx is (T*Bp, 4H), columns in [i,f,o,g].
    gx = (jnp.dot(x_ref[...], wih_ref[...], preferred_element_type=jnp.float32)
          + b_ref[...])

    # ---- 2) Recurrence: only h @ W_hh^T stays on the serial chain ----------
    h = jnp.zeros((Bp, H), jnp.float32)
    c = jnp.zeros((Bp, H), jnp.float32)
    houts = []
    for t in range(T):                                # static T: full unroll
        g = gx[t * Bp:(t + 1) * Bp, :] + jnp.dot(
            h, whh_ref[...], preferred_element_type=jnp.float32)
        s = jax.nn.sigmoid(g[:, :3 * H])              # [i | f | o] in one EUP op
        g_g = jnp.tanh(g[:, 3 * H:])                  # g gate
        i_g = s[:, 0 * H:1 * H]
        f_g = s[:, 1 * H:2 * H]
        o_g = s[:, 2 * H:3 * H]
        c_new = f_g * c + i_g * g_g
        h_new = o_g * jnp.tanh(c_new)

        m = mask_ref[t * Bp:(t + 1) * Bp, :]          # (Bp, H) {0,1}, pre-broadcast
        h = h + m * (h_new - h)                       # keep old state on pads
        c = c + m * (c_new - c)
        houts.append(m * h_new)                       # pad_packed pads with 0

    hidden = jnp.concatenate(houts, axis=0)           # (T*Bp, H), register-resident

    # ---- 3) Output head: one lane-dense projection + log_softmax -----------
    logits = (jnp.dot(hidden, wout_ref[...],
                      preferred_element_type=jnp.float32) + bout_ref[...])
    mx = jnp.max(logits, axis=-1, keepdims=True)
    lse = mx + jnp.log(jnp.sum(jnp.exp(logits - mx), axis=-1, keepdims=True))
    out_ref[...] = logits - lse                       # (T*Bp, 128) unmasked store


def lstm_pos_tagger_forward(inputs, lengths, params):
    """inputs: (B, T) int32 token ids; lengths: (B,) int32.
    Returns log-probs (B, T, C), matching the PyTorch module."""
    emb_table, w_ih, w_hh, b_ih, b_hh, w_out, b_out = (
        params["emb"], params["w_ih"], params["w_hh"],
        params["b_ih"], params["b_hh"], params["w_out"], params["b_out"])

    B, T = inputs.shape
    E = emb_table.shape[1]
    H = w_hh.shape[1]
    C = w_out.shape[0]
    Bp = ((B + 7) // 8) * 8            # sublane-pad batch to full vreg rows
    Cp = ((C + 127) // 128) * 128      # lane-dense output width

    # Glue: embedding gather, time-major flatten + batch pad, validity mask.
    emb = jnp.take(emb_table, inputs, axis=0)                 # (B, T, E)
    x_tm = jnp.transpose(emb, (1, 0, 2))                      # (T, B, E)
    x_tm = jnp.pad(x_tm, ((0, 0), (0, Bp - B), (0, 0)))       # (T, Bp, E)
    x2d = x_tm.reshape(T * Bp, E)                             # row t*Bp+b = x[b, t]

    valid = (jnp.arange(T, dtype=jnp.int32)[:, None]
             < lengths.astype(jnp.int32)[None, :])            # (T, B)
    valid = jnp.pad(valid, ((0, 0), (0, Bp - B)))             # pad rows -> invalid
    mask2d = jnp.broadcast_to(valid[:, :, None].astype(jnp.float32),
                              (T, Bp, H)).reshape(T * Bp, H)

    # Weight prep: permute PyTorch gate order [i,f,g,o] -> [i,f,o,g].
    perm = jnp.concatenate([jnp.arange(0 * H, 1 * H), jnp.arange(1 * H, 2 * H),
                            jnp.arange(3 * H, 4 * H), jnp.arange(2 * H, 3 * H)])
    wih_t = w_ih[perm].T                                      # (E, 4H)
    whh_t = w_hh[perm].T                                      # (H, 4H)
    bias = (b_ih + b_hh)[perm].reshape(1, 4 * H)              # (1, 4H)

    # Lane-dense output head: zero pad weight columns, -1e30 pad bias so the
    # pad classes never perturb max / logsumexp.
    wout_t = jnp.concatenate(
        [w_out.T, jnp.zeros((H, Cp - C), jnp.float32)], axis=1)      # (H, Cp)
    bout = jnp.concatenate(
        [b_out.reshape(1, C), jnp.full((1, Cp - C), -1e30, jnp.float32)],
        axis=1)                                                      # (1, Cp)

    kernel = functools.partial(_lstm_fused_kernel,
                               seq_len=T, batch_pad=Bp, hidden_dim=H)

    out2d = pl.pallas_call(
        kernel,
        out_shape=jax.ShapeDtypeStruct((T * Bp, Cp), jnp.float32),
        grid_spec=pltpu.PrefetchScalarGridSpec(
            num_scalar_prefetch=0,
            grid=(1,),                                         # whole sequence in one step
            in_specs=[
                pl.BlockSpec((T * Bp, E), lambda i: (0, 0)),       # embeddings (time-major)
                pl.BlockSpec((T * Bp, H), lambda i: (0, 0)),       # validity mask (pre-broadcast)
                pl.BlockSpec((E, 4 * H), lambda i: (0, 0)),        # W_ih^T  [i,f,o,g]
                pl.BlockSpec((H, 4 * H), lambda i: (0, 0)),        # W_hh^T  [i,f,o,g]
                pl.BlockSpec((1, 4 * H), lambda i: (0, 0)),        # b_ih + b_hh
                pl.BlockSpec((H, Cp), lambda i: (0, 0)),           # W_out^T (lane-padded)
                pl.BlockSpec((1, Cp), lambda i: (0, 0)),           # b_out   (lane-padded)
            ],
            out_specs=pl.BlockSpec((T * Bp, Cp), lambda i: (0, 0)),
        ),
        compiler_params=pltpu.CompilerParams(
            dimension_semantics=("arbitrary",)),
    )(x2d, mask2d, wih_t, whh_t, bias, wout_t, bout)

    out = out2d.reshape(T, Bp, Cp)[:, :B, :C]                  # drop pads
    return jnp.transpose(out, (1, 0, 2))                       # batch-first (B, T, C)


def _reference_forward(inputs, lengths, params):
    """Pure-JAX reference replicating the PyTorch semantics."""
    emb = jnp.take(params["emb"], inputs, axis=0)              # (B, T, E)
    B, T, E = emb.shape
    H = params["w_hh"].shape[1]
    w_ih, w_hh = params["w_ih"], params["w_hh"]
    b = params["b_ih"] + params["b_hh"]

    h = jnp.zeros((B, H), jnp.float32)
    c = jnp.zeros((B, H), jnp.float32)
    outs = []
    for t in range(T):
        x = emb[:, t, :]
        gates = x @ w_ih.T + h @ w_hh.T + b
        i_g = jax.nn.sigmoid(gates[:, :H])
        f_g = jax.nn.sigmoid(gates[:, H:2 * H])
        g_g = jnp.tanh(gates[:, 2 * H:3 * H])
        o_g = jax.nn.sigmoid(gates[:, 3 * H:])
        c_new = f_g * c + i_g * g_g
        h_new = o_g * jnp.tanh(c_new)
        mask = (lengths > t)[:, None]
        h = jnp.where(mask, h_new, h)
        c = jnp.where(mask, c_new, c)
        outs.append(jnp.where(mask, h_new, 0.0))
    hidden = jnp.stack(outs, axis=1)                           # (B, T, H)
    logits = hidden @ params["w_out"].T + params["b_out"]
    return jax.nn.log_softmax(logits, axis=-1)


if __name__ == "__main__":
    # Small, deterministic configuration.
    vocab_size, embedding_dim, hidden_dim, num_class = 30, 16, 32, 8
    batch, seq = 2, 8

    key = jax.random.PRNGKey(0)
    ks = jax.random.split(key, 8)
    params = {
        "emb":   jax.random.normal(ks[0], (vocab_size, embedding_dim), jnp.float32) * 0.1,
        "w_ih":  jax.random.normal(ks[1], (4 * hidden_dim, embedding_dim), jnp.float32) * 0.1,
        "w_hh":  jax.random.normal(ks[2], (4 * hidden_dim, hidden_dim), jnp.float32) * 0.1,
        "b_ih":  jax.random.normal(ks[3], (4 * hidden_dim,), jnp.float32) * 0.1,
        "b_hh":  jax.random.normal(ks[4], (4 * hidden_dim,), jnp.float32) * 0.1,
        "w_out": jax.random.normal(ks[5], (num_class, hidden_dim), jnp.float32) * 0.1,
        "b_out": jax.random.normal(ks[6], (num_class,), jnp.float32) * 0.1,
    }

    inputs = jax.random.randint(ks[7], (batch, seq), 0, vocab_size, dtype=jnp.int32)
    lengths = jnp.array([seq, 5], dtype=jnp.int32)   # max length == seq (as pad_packed would give)

    out = lstm_pos_tagger_forward(inputs, lengths, params)
    out = jax.block_until_ready(out)

    ref = _reference_forward(inputs, lengths, params)
    assert out.shape == (batch, seq, num_class)
    assert jnp.allclose(out, ref, atol=1e-4, rtol=1e-4), "mismatch vs reference"

    print("KERNEL_OK")
</pallas_src>

<mosaic_0001>
module attributes {stable_mosaic.version = 11 : i64} {
  func.func @_lstm_fused_kernel(%arg0: i32, %arg1: memref<64x16xf32, #tpu.memory_space<vmem>>, %arg2: memref<64x32xf32, #tpu.memory_space<vmem>>, %arg3: memref<16x128xf32, #tpu.memory_space<vmem>>, %arg4: memref<32x128xf32, #tpu.memory_space<vmem>>, %arg5: memref<1x128xf32, #tpu.memory_space<vmem>>, %arg6: memref<32x128xf32, #tpu.memory_space<vmem>>, %arg7: memref<1x128xf32, #tpu.memory_space<vmem>>, %arg8: memref<64x128xf32, #tpu.memory_space<vmem>>) attributes {dimension_semantics = [#tpu.dimension_semantics<arbitrary>], iteration_bounds = array<i64: 1>, scalar_prefetch = 0 : i64, scratch_operands = 0 : i64, tpu.core_type = #tpu.core_type<tc>, window_params = [{pipeline_mode = #tpu.pipeline_mode<synchronous>, transform_indices = @transform_0, window_bounds = array<i64: 64, 16>}, {pipeline_mode = #tpu.pipeline_mode<synchronous>, transform_indices = @transform_1, window_bounds = array<i64: 64, 32>}, {pipeline_mode = #tpu.pipeline_mode<synchronous>, transform_indices = @transform_2, window_bounds = array<i64: 16, 128>}, {pipeline_mode = #tpu.pipeline_mode<synchronous>, transform_indices = @transform_3, window_bounds = array<i64: 32, 128>}, {pipeline_mode = #tpu.pipeline_mode<synchronous>, transform_indices = @transform_4, window_bounds = array<i64: 1, 128>}, {pipeline_mode = #tpu.pipeline_mode<synchronous>, transform_indices = @transform_5, window_bounds = array<i64: 32, 128>}, {pipeline_mode = #tpu.pipeline_mode<synchronous>, transform_indices = @transform_6, window_bounds = array<i64: 1, 128>}, {pipeline_mode = #tpu.pipeline_mode<synchronous>, transform_indices = @transform_7, window_bounds = array<i64: 64, 128>}]} {
    %c0 = arith.constant 0 : index
    %c0_0 = arith.constant 0 : index
    %0 = vector.load %arg1[%c0, %c0_0] : memref<64x16xf32, #tpu.memory_space<vmem>>, vector<64x16xf32>
    %c0_1 = arith.constant 0 : index
    %c0_2 = arith.constant 0 : index
    %1 = vector.load %arg3[%c0_1, %c0_2] : memref<16x128xf32, #tpu.memory_space<vmem>>, vector<16x128xf32>
    %cst = arith.constant dense<0.000000e+00> : vector<64x128xf32>
    %2 = tpu.matmul %0, %1, %cst {dimension_numbers = #tpu.dot_dimension_numbers<[1], [0], [0], [1], [0, 0, 1, 1], [], []>} : vector<64x16xf32>, vector<16x128xf32>, vector<64x128xf32> -> vector<64x128xf32>
    %c0_3 = arith.constant 0 : index
    %c0_4 = arith.constant 0 : index
    %3 = vector.load %arg5[%c0_3, %c0_4] : memref<1x128xf32, #tpu.memory_space<vmem>>, vector<1x128xf32>
    %4 = vector.broadcast %3 : vector<1x128xf32> to vector<64x128xf32>
    %5 = arith.addf %2, %4 : vector<64x128xf32>
    %cst_5 = arith.constant 0.000000e+00 : f32
    %6 = vector.broadcast %cst_5 : f32 to vector<8x32xf32>
    %cst_6 = arith.constant 0.000000e+00 : f32
    %7 = vector.broadcast %cst_6 : f32 to vector<8x32xf32>
    %8 = vector.extract_strided_slice %5 {offsets = [0, 0], sizes = [8, 128], strides = [1, 1]} : vector<64x128xf32> to vector<8x128xf32>
    %c0_7 = arith.constant 0 : index
    %c0_8 = arith.constant 0 : index
    %9 = vector.load %arg4[%c0_7, %c0_8] : memref<32x128xf32, #tpu.memory_space<vmem>>, vector<32x128xf32>
    %cst_9 = arith.constant dense<0.000000e+00> : vector<8x128xf32>
    %10 = tpu.matmul %6, %9, %cst_9 {dimension_numbers = #tpu.dot_dimension_numbers<[1], [0], [0], [1], [0, 0, 1, 1], [], []>} : vector<8x32xf32>, vector<32x128xf32>, vector<8x128xf32> -> vector<8x128xf32>
    %11 = arith.addf %8, %10 : vector<8x128xf32>
    %12 = vector.extract_strided_slice %11 {offsets = [0, 0], sizes = [8, 96], strides = [1, 1]} : vector<8x128xf32> to vector<8x96xf32>
    %13 = arith.negf %12 : vector<8x96xf32>
    %14 = math.exp %13 : vector<8x96xf32>
    %cst_10 = arith.constant 1.000000e+00 : f32
    %15 = vector.broadcast %cst_10 : f32 to vector<8x96xf32>
    %16 = arith.addf %15, %14 : vector<8x96xf32>
    %17 = arith.divf %15, %16 : vector<8x96xf32>
    %18 = vector.extract_strided_slice %11 {offsets = [0, 96], sizes = [8, 32], strides = [1, 1]} : vector<8x128xf32> to vector<8x32xf32>
    %19 = math.tanh %18 : vector<8x32xf32>
    %20 = vector.extract_strided_slice %17 {offsets = [0, 0], sizes = [8, 32], strides = [1, 1]} : vector<8x96xf32> to vector<8x32xf32>
    %21 = vector.extract_strided_slice %17 {offsets = [0, 32], sizes = [8, 32], strides = [1, 1]} : vector<8x96xf32> to vector<8x32xf32>
    %22 = vector.extract_strided_slice %17 {offsets = [0, 64], sizes = [8, 32], strides = [1, 1]} : vector<8x96xf32> to vector<8x32xf32>
    %23 = arith.mulf %21, %7 : vector<8x32xf32>
    %24 = arith.mulf %20, %19 : vector<8x32xf32>
    %25 = arith.addf %23, %24 : vector<8x32xf32>
    %26 = math.tanh %25 : vector<8x32xf32>
    %27 = arith.mulf %22, %26 : vector<8x32xf32>
    %c0_11 = arith.constant 0 : index
    %c0_12 = arith.constant 0 : index
    %28 = vector.load %arg2[%c0_11, %c0_12] : memref<64x32xf32, #tpu.memory_space<vmem>>, vector<8x32xf32>
    %29 = arith.subf %27, %6 : vector<8x32xf32>
    %30 = arith.mulf %28, %29 : vector<8x32xf32>
    %31 = arith.addf %6, %30 : vector<8x32xf32>
    %32 = arith.subf %25, %7 : vector<8x32xf32>
    %33 = arith.mulf %28, %32 : vector<8x32xf32>
    %34 = arith.addf %7, %33 : vector<8x32xf32>
    %35 = arith.mulf %28, %27 : vector<8x32xf32>
    %36 = vector.extract_strided_slice %5 {offsets = [8, 0], sizes = [8, 128], strides = [1, 1]} : vector<64x128xf32> to vector<8x128xf32>
    %c0_13 = arith.constant 0 : index
    %c0_14 = arith.constant 0 : index
    %37 = vector.load %arg4[%c0_13, %c0_14] : memref<32x128xf32, #tpu.memory_space<vmem>>, vector<32x128xf32>
    %cst_15 = arith.constant dense<0.000000e+00> : vector<8x128xf32>
    %38 = tpu.matmul %31, %37, %cst_15 {dimension_numbers = #tpu.dot_dimension_numbers<[1], [0], [0], [1], [0, 0, 1, 1], [], []>} : vector<8x32xf32>, vector<32x128xf32>, vector<8x128xf32> -> vector<8x128xf32>
    %39 = arith.addf %36, %38 : vector<8x128xf32>
    %40 = vector.extract_strided_slice %39 {offsets = [0, 0], sizes = [8, 96], strides = [1, 1]} : vector<8x128xf32> to vector<8x96xf32>
    %41 = arith.negf %40 : vector<8x96xf32>
    %42 = math.exp %41 : vector<8x96xf32>
    %cst_16 = arith.constant 1.000000e+00 : f32
    %43 = vector.broadcast %cst_16 : f32 to vector<8x96xf32>
    %44 = arith.addf %43, %42 : vector<8x96xf32>
    %45 = arith.divf %43, %44 : vector<8x96xf32>
    %46 = vector.extract_strided_slice %39 {offsets = [0, 96], sizes = [8, 32], strides = [1, 1]} : vector<8x128xf32> to vector<8x32xf32>
    %47 = math.tanh %46 : vector<8x32xf32>
    %48 = vector.extract_strided_slice %45 {offsets = [0, 0], sizes = [8, 32], strides = [1, 1]} : vector<8x96xf32> to vector<8x32xf32>
    %49 = vector.extract_strided_slice %45 {offsets = [0, 32], sizes = [8, 32], strides = [1, 1]} : vector<8x96xf32> to vector<8x32xf32>
    %50 = vector.extract_strided_slice %45 {offsets = [0, 64], sizes = [8, 32], strides = [1, 1]} : vector<8x96xf32> to vector<8x32xf32>
    %51 = arith.mulf %49, %34 : vector<8x32xf32>
    %52 = arith.mulf %48, %47 : vector<8x32xf32>
    %53 = arith.addf %51, %52 : vector<8x32xf32>
    %54 = math.tanh %53 : vector<8x32xf32>
    %55 = arith.mulf %50, %54 : vector<8x32xf32>
    %c8 = arith.constant 8 : index
    %c0_17 = arith.constant 0 : index
    %56 = vector.load %arg2[%c8, %c0_17] : memref<64x32xf32, #tpu.memory_space<vmem>>, vector<8x32xf32>
    %57 = arith.subf %55, %31 : vector<8x32xf32>
    %58 = arith.mulf %56, %57 : vector<8x32xf32>
    %59 = arith.addf %31, %58 : vector<8x32xf32>
    %60 = arith.subf %53, %34 : vector<8x32xf32>
    %61 = arith.mulf %56, %60 : vector<8x32xf32>
    %62 = arith.addf %34, %61 : vector<8x32xf32>
    %63 = arith.mulf %56, %55 : vector<8x32xf32>
    %64 = vector.extract_strided_slice %5 {offsets = [16, 0], sizes = [8, 128], strides = [1, 1]} : vector<64x128xf32> to vector<8x128xf32>
    %c0_18 = arith.constant 0 : index
    %c0_19 = arith.constant 0 : index
    %65 = vector.load %arg4[%c0_18, %c0_19] : memref<32x128xf32, #tpu.memory_space<vmem>>, vector<32x128xf32>
    %cst_20 = arith.constant dense<0.000000e+00> : vector<8x128xf32>
    %66 = tpu.matmul %59, %65, %cst_20 {dimension_numbers = #tpu.dot_dimension_numbers<[1], [0], [0], [1], [0, 0, 1, 1], [], []>} : vector<8x32xf32>, vector<32x128xf32>, vector<8x128xf32> -> vector<8x128xf32>
    %67 = arith.addf %64, %66 : vector<8x128xf32>
    %68 = vector.extract_strided_slice %67 {offsets = [0, 0], sizes = [8, 96], strides = [1, 1]} : vector<8x128xf32> to vector<8x96xf32>
    %69 = arith.negf %68 : vector<8x96xf32>
    %70 = math.exp %69 : vector<8x96xf32>
    %cst_21 = arith.constant 1.000000e+00 : f32
    %71 = vector.broadcast %cst_21 : f32 to vector<8x96xf32>
    %72 = arith.addf %71, %70 : vector<8x96xf32>
    %73 = arith.divf %71, %72 : vector<8x96xf32>
    %74 = vector.extract_strided_slice %67 {offsets = [0, 96], sizes = [8, 32], strides = [1, 1]} : vector<8x128xf32> to vector<8x32xf32>
    %75 = math.tanh %74 : vector<8x32xf32>
    %76 = vector.extract_strided_slice %73 {offsets = [0, 0], sizes = [8, 32], strides = [1, 1]} : vector<8x96xf32> to vector<8x32xf32>
    %77 = vector.extract_strided_slice %73 {offsets = [0, 32], sizes = [8, 32], strides = [1, 1]} : vector<8x96xf32> to vector<8x32xf32>
    %78 = vector.extract_strided_slice %73 {offsets = [0, 64], sizes = [8, 32], strides = [1, 1]} : vector<8x96xf32> to vector<8x32xf32>
    %79 = arith.mulf %77, %62 : vector<8x32xf32>
    %80 = arith.mulf %76, %75 : vector<8x32xf32>
    %81 = arith.addf %79, %80 : vector<8x32xf32>
    %82 = math.tanh %81 : vector<8x32xf32>
    %83 = arith.mulf %78, %82 : vector<8x32xf32>
    %c16 = arith.constant 16 : index
    %c0_22 = arith.constant 0 : index
    %84 = vector.load %arg2[%c16, %c0_22] : memref<64x32xf32, #tpu.memory_space<vmem>>, vector<8x32xf32>
    %85 = arith.subf %83, %59 : vector<8x32xf32>
    %86 = arith.mulf %84, %85 : vector<8x32xf32>
    %87 = arith.addf %59, %86 : vector<8x32xf32>
    %88 = arith.subf %81, %62 : vector<8x32xf32>
    %89 = arith.mulf %84, %88 : vector<8x32xf32>
    %90 = arith.addf %62, %89 : vector<8x32xf32>
    %91 = arith.mulf %84, %83 : vector<8x32xf32>
    %92 = vector.extract_strided_slice %5 {offsets = [24, 0], sizes = [8, 128], strides = [1, 1]} : vector<64x128xf32> to vector<8x128xf32>
    %c0_23 = arith.constant 0 : index
    %c0_24 = arith.constant 0 : index
    %93 = vector.load %arg4[%c0_23, %c0_24] : memref<32x128xf32, #tpu.memory_space<vmem>>, vector<32x128xf32>
    %cst_25 = arith.constant dense<0.000000e+00> : vector<8x128xf32>
    %94 = tpu.matmul %87, %93, %cst_25 {dimension_numbers = #tpu.dot_dimension_numbers<[1], [0], [0], [1], [0, 0, 1, 1], [], []>} : vector<8x32xf32>, vector<32x128xf32>, vector<8x128xf32> -> vector<8x128xf32>
    %95 = arith.addf %92, %94 : vector<8x128xf32>
    %96 = vector.extract_strided_slice %95 {offsets = [0, 0], sizes = [8, 96], strides = [1, 1]} : vector<8x128xf32> to vector<8x96xf32>
    %97 = arith.negf %96 : vector<8x96xf32>
    %98 = math.exp %97 : vector<8x96xf32>
    %cst_26 = arith.constant 1.000000e+00 : f32
    %99 = vector.broadcast %cst_26 : f32 to vector<8x96xf32>
    %100 = arith.addf %99, %98 : vector<8x96xf32>
    %101 = arith.divf %99, %100 : vector<8x96xf32>
    %102 = vector.extract_strided_slice %95 {offsets = [0, 96], sizes = [8, 32], strides = [1, 1]} : vector<8x128xf32> to vector<8x32xf32>
    %103 = math.tanh %102 : vector<8x32xf32>
    %104 = vector.extract_strided_slice %101 {offsets = [0, 0], sizes = [8, 32], strides = [1, 1]} : vector<8x96xf32> to vector<8x32xf32>
    %105 = vector.extract_strided_slice %101 {offsets = [0, 32], sizes = [8, 32], strides = [1, 1]} : vector<8x96xf32> to vector<8x32xf32>
    %106 = vector.extract_strided_slice %101 {offsets = [0, 64], sizes = [8, 32], strides = [1, 1]} : vector<8x96xf32> to vector<8x32xf32>
    %107 = arith.mulf %105, %90 : vector<8x32xf32>
    %108 = arith.mulf %104, %103 : vector<8x32xf32>
    %109 = arith.addf %107, %108 : vector<8x32xf32>
    %110 = math.tanh %109 : vector<8x32xf32>
    %111 = arith.mulf %106, %110 : vector<8x32xf32>
    %c24 = arith.constant 24 : index
    %c0_27 = arith.constant 0 : index
    %112 = vector.load %arg2[%c24, %c0_27] : memref<64x32xf32, #tpu.memory_space<vmem>>, vector<8x32xf32>
    %113 = arith.subf %111, %87 : vector<8x32xf32>
    %114 = arith.mulf %112, %113 : vector<8x32xf32>
    %115 = arith.addf %87, %114 : vector<8x32xf32>
    %116 = arith.subf %109, %90 : vector<8x32xf32>
    %117 = arith.mulf %112, %116 : vector<8x32xf32>
    %118 = arith.addf %90, %117 : vector<8x32xf32>
    %119 = arith.mulf %112, %111 : vector<8x32xf32>
    %120 = vector.extract_strided_slice %5 {offsets = [32, 0], sizes = [8, 128], strides = [1, 1]} : vector<64x128xf32> to vector<8x128xf32>
    %c0_28 = arith.constant 0 : index
    %c0_29 = arith.constant 0 : index
    %121 = vector.load %arg4[%c0_28, %c0_29] : memref<32x128xf32, #tpu.memory_space<vmem>>, vector<32x128xf32>
    %cst_30 = arith.constant dense<0.000000e+00> : vector<8x128xf32>
    %122 = tpu.matmul %115, %121, %cst_30 {dimension_numbers = #tpu.dot_dimension_numbers<[1], [0], [0], [1], [0, 0, 1, 1], [], []>} : vector<8x32xf32>, vector<32x128xf32>, vector<8x128xf32> -> vector<8x128xf32>
    %123 = arith.addf %120, %122 : vector<8x128xf32>
    %124 = vector.extract_strided_slice %123 {offsets = [0, 0], sizes = [8, 96], strides = [1, 1]} : vector<8x128xf32> to vector<8x96xf32>
    %125 = arith.negf %124 : vector<8x96xf32>
    %126 = math.exp %125 : vector<8x96xf32>
    %cst_31 = arith.constant 1.000000e+00 : f32
    %127 = vector.broadcast %cst_31 : f32 to vector<8x96xf32>
    %128 = arith.addf %127, %126 : vector<8x96xf32>
    %129 = arith.divf %127, %128 : vector<8x96xf32>
    %130 = vector.extract_strided_slice %123 {offsets = [0, 96], sizes = [8, 32], strides = [1, 1]} : vector<8x128xf32> to vector<8x32xf32>
    %131 = math.tanh %130 : vector<8x32xf32>
    %132 = vector.extract_strided_slice %129 {offsets = [0, 0], sizes = [8, 32], strides = [1, 1]} : vector<8x96xf32> to vector<8x32xf32>
    %133 = vector.extract_strided_slice %129 {offsets = [0, 32], sizes = [8, 32], strides = [1, 1]} : vector<8x96xf32> to vector<8x32xf32>
    %134 = vector.extract_strided_slice %129 {offsets = [0, 64], sizes = [8, 32], strides = [1, 1]} : vector<8x96xf32> to vector<8x32xf32>
    %135 = arith.mulf %133, %118 : vector<8x32xf32>
    %136 = arith.mulf %132, %131 : vector<8x32xf32>
    %137 = arith.addf %135, %136 : vector<8x32xf32>
    %138 = math.tanh %137 : vector<8x32xf32>
    %139 = arith.mulf %134, %138 : vector<8x32xf32>
    %c32 = arith.constant 32 : index
    %c0_32 = arith.constant 0 : index
    %140 = vector.load %arg2[%c32, %c0_32] : memref<64x32xf32, #tpu.memory_space<vmem>>, vector<8x32xf32>
    %141 = arith.subf %139, %115 : vector<8x32xf32>
    %142 = arith.mulf %140, %141 : vector<8x32xf32>
    %143 = arith.addf %115, %142 : vector<8x32xf32>
    %144 = arith.subf %137, %118 : vector<8x32xf32>
    %145 = arith.mulf %140, %144 : vector<8x32xf32>
    %146 = arith.addf %118, %145 : vector<8x32xf32>
    %147 = arith.mulf %140, %139 : vector<8x32xf32>
    %148 = vector.extract_strided_slice %5 {offsets = [40, 0], sizes = [8, 128], strides = [1, 1]} : vector<64x128xf32> to vector<8x128xf32>
    %c0_33 = arith.constant 0 : index
    %c0_34 = arith.constant 0 : index
    %149 = vector.load %arg4[%c0_33, %c0_34] : memref<32x128xf32, #tpu.memory_space<vmem>>, vector<32x128xf32>
    %cst_35 = arith.constant dense<0.000000e+00> : vector<8x128xf32>
    %150 = tpu.matmul %143, %149, %cst_35 {dimension_numbers = #tpu.dot_dimension_numbers<[1], [0], [0], [1], [0, 0, 1, 1], [], []>} : vector<8x32xf32>, vector<32x128xf32>, vector<8x128xf32> -> vector<8x128xf32>
    %151 = arith.addf %148, %150 : vector<8x128xf32>
    %152 = vector.extract_strided_slice %151 {offsets = [0, 0], sizes = [8, 96], strides = [1, 1]} : vector<8x128xf32> to vector<8x96xf32>
    %153 = arith.negf %152 : vector<8x96xf32>
    %154 = math.exp %153 : vector<8x96xf32>
    %cst_36 = arith.constant 1.000000e+00 : f32
    %155 = vector.broadcast %cst_36 : f32 to vector<8x96xf32>
    %156 = arith.addf %155, %154 : vector<8x96xf32>
    %157 = arith.divf %155, %156 : vector<8x96xf32>
    %158 = vector.extract_strided_slice %151 {offsets = [0, 96], sizes = [8, 32], strides = [1, 1]} : vector<8x128xf32> to vector<8x32xf32>
    %159 = math.tanh %158 : vector<8x32xf32>
    %160 = vector.extract_strided_slice %157 {offsets = [0, 0], sizes = [8, 32], strides = [1, 1]} : vector<8x96xf32> to vector<8x32xf32>
    %161 = vector.extract_strided_slice %157 {offsets = [0, 32], sizes = [8, 32], strides = [1, 1]} : vector<8x96xf32> to vector<8x32xf32>
    %162 = vector.extract_strided_slice %157 {offsets = [0, 64], sizes = [8, 32], strides = [1, 1]} : vector<8x96xf32> to vector<8x32xf32>
    %163 = arith.mulf %161, %146 : vector<8x32xf32>
    %164 = arith.mulf %160, %159 : vector<8x32xf32>
    %165 = arith.addf %163, %164 : vector<8x32xf32>
    %166 = math.tanh %165 : vector<8x32xf32>
    %167 = arith.mulf %162, %166 : vector<8x32xf32>
    %c40 = arith.constant 40 : index
    %c0_37 = arith.constant 0 : index
    %168 = vector.load %arg2[%c40, %c0_37] : memref<64x32xf32, #tpu.memory_space<vmem>>, vector<8x32xf32>
    %169 = arith.subf %167, %143 : vector<8x32xf32>
    %170 = arith.mulf %168, %169 : vector<8x32xf32>
    %171 = arith.addf %143, %170 : vector<8x32xf32>
    %172 = arith.subf %165, %146 : vector<8x32xf32>
    %173 = arith.mulf %168, %172 : vector<8x32xf32>
    %174 = arith.addf %146, %173 : vector<8x32xf32>
    %175 = arith.mulf %168, %167 : vector<8x32xf32>
    %176 = vector.extract_strided_slice %5 {offsets = [48, 0], sizes = [8, 128], strides = [1, 1]} : vector<64x128xf32> to vector<8x128xf32>
    %c0_38 = arith.constant 0 : index
    %c0_39 = arith.constant 0 : index
    %177 = vector.load %arg4[%c0_38, %c0_39] : memref<32x128xf32, #tpu.memory_space<vmem>>, vector<32x128xf32>
    %cst_40 = arith.constant dense<0.000000e+00> : vector<8x128xf32>
    %178 = tpu.matmul %171, %177, %cst_40 {dimension_numbers = #tpu.dot_dimension_numbers<[1], [0], [0], [1], [0, 0, 1, 1], [], []>} : vector<8x32xf32>, vector<32x128xf32>, vector<8x128xf32> -> vector<8x128xf32>
    %179 = arith.addf %176, %178 : vector<8x128xf32>
    %180 = vector.extract_strided_slice %179 {offsets = [0, 0], sizes = [8, 96], strides = [1, 1]} : vector<8x128xf32> to vector<8x96xf32>
    %181 = arith.negf %180 : vector<8x96xf32>
    %182 = math.exp %181 : vector<8x96xf32>
    %cst_41 = arith.constant 1.000000e+00 : f32
    %183 = vector.broadcast %cst_41 : f32 to vector<8x96xf32>
    %184 = arith.addf %183, %182 : vector<8x96xf32>
    %185 = arith.divf %183, %184 : vector<8x96xf32>
    %186 = vector.extract_strided_slice %179 {offsets = [0, 96], sizes = [8, 32], strides = [1, 1]} : vector<8x128xf32> to vector<8x32xf32>
    %187 = math.tanh %186 : vector<8x32xf32>
    %188 = vector.extract_strided_slice %185 {offsets = [0, 0], sizes = [8, 32], strides = [1, 1]} : vector<8x96xf32> to vector<8x32xf32>
    %189 = vector.extract_strided_slice %185 {offsets = [0, 32], sizes = [8, 32], strides = [1, 1]} : vector<8x96xf32> to vector<8x32xf32>
    %190 = vector.extract_strided_slice %185 {offsets = [0, 64], sizes = [8, 32], strides = [1, 1]} : vector<8x96xf32> to vector<8x32xf32>
    %191 = arith.mulf %189, %174 : vector<8x32xf32>
    %192 = arith.mulf %188, %187 : vector<8x32xf32>
    %193 = arith.addf %191, %192 : vector<8x32xf32>
    %194 = math.tanh %193 : vector<8x32xf32>
    %195 = arith.mulf %190, %194 : vector<8x32xf32>
    %c48 = arith.constant 48 : index
    %c0_42 = arith.constant 0 : index
    %196 = vector.load %arg2[%c48, %c0_42] : memref<64x32xf32, #tpu.memory_space<vmem>>, vector<8x32xf32>
    %197 = arith.subf %195, %171 : vector<8x32xf32>
    %198 = arith.mulf %196, %197 : vector<8x32xf32>
    %199 = arith.addf %171, %198 : vector<8x32xf32>
    %200 = arith.subf %193, %174 : vector<8x32xf32>
    %201 = arith.mulf %196, %200 : vector<8x32xf32>
    %202 = arith.addf %174, %201 : vector<8x32xf32>
    %203 = arith.mulf %196, %195 : vector<8x32xf32>
    %204 = vector.extract_strided_slice %5 {offsets = [56, 0], sizes = [8, 128], strides = [1, 1]} : vector<64x128xf32> to vector<8x128xf32>
    %c0_43 = arith.constant 0 : index
    %c0_44 = arith.constant 0 : index
    %205 = vector.load %arg4[%c0_43, %c0_44] : memref<32x128xf32, #tpu.memory_space<vmem>>, vector<32x128xf32>
    %cst_45 = arith.constant dense<0.000000e+00> : vector<8x128xf32>
    %206 = tpu.matmul %199, %205, %cst_45 {dimension_numbers = #tpu.dot_dimension_numbers<[1], [0], [0], [1], [0, 0, 1, 1], [], []>} : vector<8x32xf32>, vector<32x128xf32>, vector<8x128xf32> -> vector<8x128xf32>
    %207 = arith.addf %204, %206 : vector<8x128xf32>
    %208 = vector.extract_strided_slice %207 {offsets = [0, 0], sizes = [8, 96], strides = [1, 1]} : vector<8x128xf32> to vector<8x96xf32>
    %209 = arith.negf %208 : vector<8x96xf32>
    %210 = math.exp %209 : vector<8x96xf32>
    %cst_46 = arith.constant 1.000000e+00 : f32
    %211 = vector.broadcast %cst_46 : f32 to vector<8x96xf32>
    %212 = arith.addf %211, %210 : vector<8x96xf32>
    %213 = arith.divf %211, %212 : vector<8x96xf32>
    %214 = vector.extract_strided_slice %207 {offsets = [0, 96], sizes = [8, 32], strides = [1, 1]} : vector<8x128xf32> to vector<8x32xf32>
    %215 = math.tanh %214 : vector<8x32xf32>
    %216 = vector.extract_strided_slice %213 {offsets = [0, 0], sizes = [8, 32], strides = [1, 1]} : vector<8x96xf32> to vector<8x32xf32>
    %217 = vector.extract_strided_slice %213 {offsets = [0, 32], sizes = [8, 32], strides = [1, 1]} : vector<8x96xf32> to vector<8x32xf32>
    %218 = vector.extract_strided_slice %213 {offsets = [0, 64], sizes = [8, 32], strides = [1, 1]} : vector<8x96xf32> to vector<8x32xf32>
    %219 = arith.mulf %217, %202 : vector<8x32xf32>
    %220 = arith.mulf %216, %215 : vector<8x32xf32>
    %221 = arith.addf %219, %220 : vector<8x32xf32>
    %222 = math.tanh %221 : vector<8x32xf32>
    %223 = arith.mulf %218, %222 : vector<8x32xf32>
    %c56 = arith.constant 56 : index
    %c0_47 = arith.constant 0 : index
    %224 = vector.load %arg2[%c56, %c0_47] : memref<64x32xf32, #tpu.memory_space<vmem>>, vector<8x32xf32>
    %225 = arith.mulf %224, %223 : vector<8x32xf32>
    %226 = tpu.concatenate %35, %63, %91, %119, %147, %175, %203, %225 in 0 : vector<8x32xf32>, vector<8x32xf32>, vector<8x32xf32>, vector<8x32xf32>, vector<8x32xf32>, vector<8x32xf32>, vector<8x32xf32>, vector<8x32xf32> -> vector<64x32xf32>
    %c0_48 = arith.constant 0 : index
    %c0_49 = arith.constant 0 : index
    %227 = vector.load %arg6[%c0_48, %c0_49] : memref<32x128xf32, #tpu.memory_space<vmem>>, vector<32x128xf32>
    %cst_50 = arith.constant dense<0.000000e+00> : vector<64x128xf32>
    %228 = tpu.matmul %226, %227, %cst_50 {dimension_numbers = #tpu.dot_dimension_numbers<[1], [0], [0], [1], [0, 0, 1, 1], [], []>} : vector<64x32xf32>, vector<32x128xf32>, vector<64x128xf32> -> vector<64x128xf32>
    %c0_51 = arith.constant 0 : index
    %c0_52 = arith.constant 0 : index
    %229 = vector.load %arg7[%c0_51, %c0_52] : memref<1x128xf32, #tpu.memory_space<vmem>>, vector<1x128xf32>
    %230 = vector.broadcast %229 : vector<1x128xf32> to vector<64x128xf32>
    %231 = arith.addf %228, %230 : vector<64x128xf32>
    %cst_53 = arith.constant dense<0xFF800000> : vector<64xf32>
    %232 = vector.multi_reduction <maximumf>, %231, %cst_53 [1] : vector<64x128xf32> to vector<64xf32>
    %233 = vector.shape_cast %232 : vector<64xf32> to vector<64x1xf32>
    %234 = vector.broadcast %233 : vector<64x1xf32> to vector<64x128xf32>
    %235 = arith.subf %231, %234 : vector<64x128xf32>
    %236 = math.exp %235 : vector<64x128xf32>
    %cst_54 = arith.constant dense<0.000000e+00> : vector<64xf32>
    %237 = vector.multi_reduction <add>, %236, %cst_54 [1] : vector<64x128xf32> to vector<64xf32>
    %238 = vector.shape_cast %237 : vector<64xf32> to vector<64x1xf32>
    %239 = math.log %238 : vector<64x1xf32>
    %240 = arith.addf %233, %239 : vector<64x1xf32>
    %241 = vector.broadcast %240 : vector<64x1xf32> to vector<64x128xf32>
    %242 = arith.subf %231, %241 : vector<64x128xf32>
    %c0_55 = arith.constant 0 : index
    %c0_56 = arith.constant 0 : index
    %243 = vector.load %arg8[%c0_55, %c0_56] : memref<64x128xf32, #tpu.memory_space<vmem>>, vector<64x128xf32>
    tpu.vector_store %arg8[%c0_55, %c0_56], %242 {strides = array<i32>} : memref<64x128xf32, #tpu.memory_space<vmem>>, vector<64x128xf32>,
    return
  }
  func.func @transform_0(%arg0: i32) -> (i32, i32) {
    %c0_i32 = arith.constant 0 : i32
    %c0_i32_0 = arith.constant 0 : i32
    %c0_i32_1 = arith.constant 0 : i32
    return %c0_i32, %c0_i32_0 : i32, i32
  }
  func.func @transform_1(%arg0: i32) -> (i32, i32) {
    %c0_i32 = arith.constant 0 : i32
    %c0_i32_0 = arith.constant 0 : i32
    %c0_i32_1 = arith.constant 0 : i32
    return %c0_i32, %c0_i32_0 : i32, i32
  }
  func.func @transform_2(%arg0: i32) -> (i32, i32) {
    %c0_i32 = arith.constant 0 : i32
    %c0_i32_0 = arith.constant 0 : i32
    %c0_i32_1 = arith.constant 0 : i32
    return %c0_i32, %c0_i32_0 : i32, i32
  }
  func.func @transform_3(%arg0: i32) -> (i32, i32) {
    %c0_i32 = arith.constant 0 : i32
    %c0_i32_0 = arith.constant 0 : i32
    %c0_i32_1 = arith.constant 0 : i32
    return %c0_i32, %c0_i32_0 : i32, i32
  }
  func.func @transform_4(%arg0: i32) -> (i32, i32) {
    %c0_i32 = arith.constant 0 : i32
    %c0_i32_0 = arith.constant 0 : i32
    %c0_i32_1 = arith.constant 0 : i32
    return %c0_i32, %c0_i32_0 : i32, i32
  }
  func.func @transform_5(%arg0: i32) -> (i32, i32) {
    %c0_i32 = arith.constant 0 : i32
    %c0_i32_0 = arith.constant 0 : i32
    %c0_i32_1 = arith.constant 0 : i32
    return %c0_i32, %c0_i32_0 : i32, i32
  }
  func.func @transform_6(%arg0: i32) -> (i32, i32) {
    %c0_i32 = arith.constant 0 : i32
    %c0_i32_0 = arith.constant 0 : i32
    %c0_i32_1 = arith.constant 0 : i32
    return %c0_i32, %c0_i32_0 : i32, i32
  }
  func.func @transform_7(%arg0: i32) -> (i32, i32) {
    %c0_i32 = arith.constant 0 : i32
    %c0_i32_0 = arith.constant 0 : i32
    %c0_i32_1 = arith.constant 0 : i32
    return %c0_i32, %c0_i32_0 : i32, i32
  }
}

</mosaic_0001>

<llo_original>
// kernel: tpu_custom_call.1
$region0: #{tpu_custom_call.1}
  #allocation0 [shape = 'u32[]', space=smem, size = 0x4, offset = 0x4, fixed_abs, tag = 'smem constant byte address 0x4 - core index']
  #allocation1 [shape = 'u32[144,128]{1,0:T(1,128)}', space=vmem, size = 0x12000, scoped, tag = 'internal scratch']
  %s0 = inlined_call_operand.vmem [shape: f32[64,16], index: 0, kind: input, shape index: {}]
  %s1 = inlined_call_operand.vmem [shape: f32[64,32], index: 1, kind: input, shape index: {}]
  %s2 = inlined_call_operand.vmem [shape: f32[16,128], index: 2, kind: input, shape index: {}]
  %s3 = inlined_call_operand.vmem [shape: f32[32,128], index: 3, kind: input, shape index: {}]
  %s4 = inlined_call_operand.vmem [shape: f32[1,128], index: 4, kind: input, shape index: {}]
  %s5 = inlined_call_operand.vmem [shape: f32[32,128], index: 5, kind: input, shape index: {}]
  %s6 = inlined_call_operand.vmem [shape: f32[1,128], index: 6, kind: input, shape index: {}]
  %s7 = inlined_call_operand.hbm [shape: f32[64,128], index: 7, kind: output, shape index: {}]
  %s8 = sld [smem:[#allocation0]]
  $region38: #{tpu_custom_call.1} parent=0
    _
  %s10 = ssub.s32 1, %s8
  %s11 = scalar_select 0, %s10, %s8
  $region1: #{tpu_custom_call.1} parent=0
    #allocation2 [shape = 'u8[32768]{0}', space=vmem, size = 0x8000, scoped, tag = 'output window, operand 0, single buffered']
    #allocation3 [shape = 's32[1]{0}', space=sflag, size = 0x4, scoped, tag = 'scoped memory for tpu_custom_call.1']
    %12 = vsyncpa [#allocation3], 0
    // Predicated region
    $region2: #{tpu_custom_call.1} parent=1 // pred_check
      _
    $region3: #{tpu_custom_call.1} parent=1 // pred_check_branch
      %14 = sbr.rel (0) target = $region5
    $region4: #{tpu_custom_call.1} parent=1 // pred_region
      _
    $region5: #{tpu_custom_call.1} parent=1 // pred_fallthru
      _
    // Predicated region
    $region6: #{tpu_custom_call.1} parent=1 // pred_check
      _
    $region7: #{tpu_custom_call.1} parent=1 // pred_check_branch
      %16 = sbr.rel (0) target = $region9
    $region8: #{tpu_custom_call.1} parent=1 // pred_region
      _
    $region9: #{tpu_custom_call.1} parent=1 // pred_fallthru
      _
    // Predicated region
    $region10: #{tpu_custom_call.1} parent=1 // pred_check
      _
    $region11: #{tpu_custom_call.1} parent=1 // pred_check_branch
      %18 = sbr.rel (0) target = $region13
    $region12: #{tpu_custom_call.1} parent=1 // pred_region
      _
    $region13: #{tpu_custom_call.1} parent=1 // pred_fallthru
      _
    // Predicated region
    $region14: #{tpu_custom_call.1} parent=1 // pred_check
      _
    $region15: #{tpu_custom_call.1} parent=1 // pred_check_branch
      %20 = sbr.rel (0) target = $region17
    $region16: #{tpu_custom_call.1} parent=1 // pred_region
      _
    $region17: #{tpu_custom_call.1} parent=1 // pred_fallthru
      _
    // Predicated region
    $region18: #{tpu_custom_call.1} parent=1 // pred_check
      _
    $region19: #{tpu_custom_call.1} parent=1 // pred_check_branch
      %22 = sbr.rel (0) target = $region21
    $region20: #{tpu_custom_call.1} parent=1 // pred_region
      _
    $region21: #{tpu_custom_call.1} parent=1 // pred_fallthru
      _
    // Predicated region
    $region22: #{tpu_custom_call.1} parent=1 // pred_check
      _
    $region23: #{tpu_custom_call.1} parent=1 // pred_check_branch
      %24 = sbr.rel (0) target = $region25
    $region24: #{tpu_custom_call.1} parent=1 // pred_region
      _
    $region25: #{tpu_custom_call.1} parent=1 // pred_fallthru
      _
    // Predicated region
    $region26: #{tpu_custom_call.1} parent=1 // pred_check
      _
    $region27: #{tpu_custom_call.1} parent=1 // pred_check_branch
      %26 = sbr.rel (0) target = $region29
    $region28: #{tpu_custom_call.1} parent=1 // pred_region
      _
    $region29: #{tpu_custom_call.1} parent=1 // pred_fallthru
      _
    %v27 = vld [vmem:[%s0] sm:$0xff]
    %v28 = vld [vmem:[%s0 + $0x8] sm:$0xff]
    %v29 = vld [vmem:[%s0 + $0x10] sm:$0xff]
    %v30 = vld [vmem:[%s0 + $0x18] sm:$0xff]
    %v31 = vld [vmem:[%s0 + $0x20] sm:$0xff]
    %v32 = vld [vmem:[%s0 + $0x28] sm:$0xff]
    %v33 = vld [vmem:[%s0 + $0x30] sm:$0xff]
    %v34 = vld [vmem:[%s0 + $0x38] sm:$0xff]
    %v35 = vld [vmem:[%s2] sm:$0xff]
    %v36 = vld [vmem:[%s2 + $0x8] sm:$0xff]
    %v37 = vld [vmem:[%s4] sm:$0x1]
    %v39 = vlaneseq
    %v40 = vshrl.u32 %v39, 7
    %v41 = vsub.s32 0, %v40
    %v42 = vrot.slane %v37, %v41
    %vm44 = vcmask 130048
    %v46 = vsel %vm44, %v27, 0
    %v49 = vsel %vm44, %v28, 0
    %v52 = vsel %vm44, %v29, 0
    %v55 = vsel %vm44, %v30, 0
    %v58 = vsel %vm44, %v31, 0
    %v61 = vsel %vm44, %v32, 0
    %v64 = vsel %vm44, %v33, 0
    %v67 = vsel %vm44, %v34, 0
    %69 = vmatprep.subr.mxu0 0.0
    %70 = vmatpush1.msra.mxu0 %v35
    %71 = vmatprep.subr.mxu0 0.0
    %72 = vmatpush1.msra.mxu0 %v36
    %73 = vmatprep.subr.mxu0 0.0
    %74 = vmatpush1.msra.mxu0 0.0
    %75 = vmatprep.subr.mxu0 0.0
    %76 = vmatpush1.msra.mxu0 0.0
    %77 = vmatprep.subr.mxu0 0.0
    %78 = vmatpush1.msra.mxu0 0.0
    %79 = vmatprep.subr.mxu0 0.0
    %80 = vmatpush1.msra.mxu0 0.0
    %81 = vmatprep.subr.mxu0 0.0
    %82 = vmatpush1.msra.mxu0 0.0
    %83 = vmatprep.subr.mxu0 0.0
    %84 = vmatpush1.msra.mxu0 0.0
    %85 = vmatprep.subr.mxu0 0.0
    %86 = vmatpush1.msra.mxu0 0.0
    %87 = vmatprep.subr.mxu0 0.0
    %88 = vmatpush1.msra.mxu0 0.0
    %89 = vmatprep.subr.mxu0 0.0
    %90 = vmatpush1.msra.mxu0 0.0
    %91 = vmatprep.subr.mxu0 0.0
    %92 = vmatpush1.msra.mxu0 0.0
    %93 = vmatprep.subr.mxu0 0.0
    %94 = vmatpush1.msra.mxu0 0.0
    %95 = vmatprep.subr.mxu0 0.0
    %96 = vmatpush1.msra.mxu0 0.0
    %97 = vmatprep.subr.mxu0 0.0
    %98 = vmatpush1.msra.mxu0 0.0
    %99 = vmatprep.subr.mxu0 0.0
    %100 = vmatpush1.msra.mxu0 0.0
    %101 = vmatprep.subr.mxu0 0.0
    %102 = vmatpush1.msra.mxu0 0.0
    %103 = vmatprep.subr.mxu0 0.0
    %104 = vmatpush1.msra.mxu0 0.0
    %105 = vmatprep.subr.mxu0 0.0
    %106 = vmatpush1.msra.mxu0 0.0
    %107 = vmatprep.subr.mxu0 0.0
    %108 = vmatpush1.msra.mxu0 0.0
    %109 = vmatprep.subr.mxu0 0.0
    %110 = vmatpush1.msra.mxu0 0.0
    %111 = vmatprep.subr.mxu0 0.0
    %112 = vmatpush1.msra.mxu0 0.0
    %113 = vmatprep.subr.mxu0 0.0
    %114 = vmatpush1.msra.mxu0 0.0
    %115 = vmatprep.subr.mxu0 0.0
    %116 = vmatpush1.msra.mxu0 0.0
    %117 = vmatprep.subr.mxu0 0.0
    %118 = vmatpush1.msra.mxu0 0.0
    %119 = vmatprep.subr.mxu0 0.0
    %120 = vmatpush1.msra.mxu0 0.0
    %121 = vmatprep.subr.mxu0 0.0
    %122 = vmatpush1.msra.mxu0 0.0
    %123 = vmatprep.subr.mxu0 0.0
    %124 = vmatpush1.msra.mxu0 0.0
    %125 = vmatprep.subr.mxu0 0.0
    %126 = vmatpush1.msra.mxu0 0.0
    %127 = vmatprep.subr.mxu0 0.0
    %128 = vmatpush1.msra.mxu0 0.0
    %129 = vmatprep.subr.mxu0 0.0
    %130 = vmatpush1.msra.mxu0 0.0
    %131 = vmatprep.subr.mxu0 0.0
    %132 = vmatpush1.msra.mxu0 0.0
    %133 = vmatprep.mubr.f32.mxu0 0.0
    %134 = vmatmul.mubr.f32.gmra.mrb[0].mxu0 %v46
    %v135 = vpop.f32.mrb[0].mxu0
    %v136 = vadd.f32 %v42, %v135
    %v137 = vpop.f32.mrb[0].mxu0
    %138 = vmatprep.mubr.f32.mxu0 0.0
    %139 = vmatmul.mubr.f32.gmra.mrb[0].mxu0 %v49
    %v140 = vpop.f32.mrb[0].mxu0
    %v141 = vadd.f32 %v42, %v140
    %v142 = vpop.f32.mrb[0].mxu0
    %143 = vmatprep.mubr.f32.mxu0 0.0
    %144 = vmatmul.mubr.f32.gmra.mrb[0].mxu0 %v52
    %v145 = vpop.f32.mrb[0].mxu0
    %v146 = vadd.f32 %v42, %v145
    %v147 = vpop.f32.mrb[0].mxu0
    %148 = vmatprep.mubr.f32.mxu0 0.0
    %149 = vmatmul.mubr.f32.gmra.mrb[0].mxu0 %v55
    %v150 = vpop.f32.mrb[0].mxu0
    %v151 = vadd.f32 %v42, %v150
    %v152 = vpop.f32.mrb[0].mxu0
    %153 = vmatprep.mubr.f32.mxu0 0.0
    %154 = vmatmul.mubr.f32.gmra.mrb[0].mxu0 %v58
    %v155 = vpop.f32.mrb[0].mxu0
    %v156 = vadd.f32 %v42, %v155
    %v157 = vpop.f32.mrb[0].mxu0
    %158 = vmatprep.mubr.f32.mxu0 0.0
    %159 = vmatmul.mubr.f32.gmra.mrb[0].mxu0 %v61
    %v160 = vpop.f32.mrb[0].mxu0
    %v161 = vadd.f32 %v42, %v160
    %v162 = vpop.f32.mrb[0].mxu0
    %163 = vmatprep.mubr.f32.mxu0 0.0
    %164 = vmatmul.mubr.f32.gmra.mrb[0].mxu0 %v64
    %v165 = vpop.f32.mrb[0].mxu0
    %v166 = vadd.f32 %v42, %v165
    %v167 = vpop.f32.mrb[0].mxu0
    %168 = vmatprep.mubr.f32.mxu0 0.0
    %169 = vmatmul.mubr.f32.gmra.mrb[0].mxu0 %v67
    %v170 = vpop.f32.mrb[0].mxu0
    %v171 = vadd.f32 %v42, %v170
    %v172 = vpop.f32.mrb[0].mxu0
    %173 = vdwg.mxu0
    %v174 = vld [vmem:[%s3] sm:$0xff]
    %v175 = vld [vmem:[%s3 + $0x8] sm:$0xff]
    %v176 = vld [vmem:[%s3 + $0x10] sm:$0xff]
    %v177 = vld [vmem:[%s3 + $0x18] sm:$0xff]
    %vm178 = vcmask 261120
    %v180 = vsel %vm178, 0.0, 0
    %182 = vmatprep.subr.mxu0 0.0
    %183 = vmatpush1.msra.mxu0 %v174
    %184 = vmatprep.subr.mxu0 0.0
    %185 = vmatpush1.msra.mxu0 %v175
    %186 = vmatprep.subr.mxu0 0.0
    %187 = vmatpush1.msra.mxu0 %v176
    %188 = vmatprep.subr.mxu0 0.0
    %189 = vmatpush1.msra.mxu0 %v177
    %190 = vmatprep.subr.mxu0 0.0
    %191 = vmatpush1.msra.mxu0 0.0
    %192 = vmatprep.subr.mxu0 0.0
    %193 = vmatpush1.msra.mxu0 0.0
    %194 = vmatprep.subr.mxu0 0.0
    %195 = vmatpush1.msra.mxu0 0.0
    %196 = vmatprep.subr.mxu0 0.0
    %197 = vmatpush1.msra.mxu0 0.0
    %198 = vmatprep.subr.mxu0 0.0
    %199 = vmatpush1.msra.mxu0 0.0
    %200 = vmatprep.subr.mxu0 0.0
    %201 = vmatpush1.msra.mxu0 0.0
    %202 = vmatprep.subr.mxu0 0.0
    %203 = vmatpush1.msra.mxu0 0.0
    %204 = vmatprep.subr.mxu0 0.0
    %205 = vmatpush1.msra.mxu0 0.0
    %206 = vmatprep.subr.mxu0 0.0
    %207 = vmatpush1.msra.mxu0 0.0
    %208 = vmatprep.subr.mxu0 0.0
    %209 = vmatpush1.msra.mxu0 0.0
    %210 = vmatprep.subr.mxu0 0.0
    %211 = vmatpush1.msra.mxu0 0.0
    %212 = vmatprep.subr.mxu0 0.0
    %213 = vmatpush1.msra.mxu0 0.0
    %214 = vmatprep.subr.mxu0 0.0
    %215 = vmatpush1.msra.mxu0 0.0
    %216 = vmatprep.subr.mxu0 0.0
    %217 = vmatpush1.msra.mxu0 0.0
    %218 = vmatprep.subr.mxu0 0.0
    %219 = vmatpush1.msra.mxu0 0.0
    %220 = vmatprep.subr.mxu0 0.0
    %221 = vmatpush1.msra.mxu0 0.0
    %222 = vmatprep.subr.mxu0 0.0
    %223 = vmatpush1.msra.mxu0 0.0
    %224 = vmatprep.subr.mxu0 0.0
    %225 = vmatpush1.msra.mxu0 0.0
    %226 = vmatprep.subr.mxu0 0.0
    %227 = vmatpush1.msra.mxu0 0.0
    %228 = vmatprep.subr.mxu0 0.0
    %229 = vmatpush1.msra.mxu0 0.0
    %230 = vmatprep.subr.mxu0 0.0
    %231 = vmatpush1.msra.mxu0 0.0
    %232 = vmatprep.subr.mxu0 0.0
    %233 = vmatpush1.msra.mxu0 0.0
    %234 = vmatprep.subr.mxu0 0.0
    %235 = vmatpush1.msra.mxu0 0.0
    %236 = vmatprep.subr.mxu0 0.0
    %237 = vmatpush1.msra.mxu0 0.0
    %238 = vmatprep.subr.mxu0 0.0
    %239 = vmatpush1.msra.mxu0 0.0
    %240 = vmatprep.subr.mxu0 0.0
    %241 = vmatpush1.msra.mxu0 0.0
    %242 = vmatprep.subr.mxu0 0.0
    %243 = vmatpush1.msra.mxu0 0.0
    %244 = vmatprep.subr.mxu0 0.0
    %245 = vmatpush1.msra.mxu0 0.0
    %246 = vmatprep.mubr.f32.mxu0 0.0
    %247 = vmatmul.mubr.f32.gmra.mrb[0].mxu0 %v180
    %v248 = vpop.f32.mrb[0].mxu0
    %v249 = vadd.f32 0.0, %v248
    %v250 = vpop.f32.mrb[0].mxu0
    %251 = vdwg.mxu0
    %v252 = vadd.f32 %v136, %v249
    %v253 = vxor.u32 %v252, 2147483648
    %v254 = vmul.f32 %v253, 1.442695
    %v255 = vpow.pop %v254
    %v256 = vadd.f32 %v255, 1.0
    %v257 = vrcp.pop %v256
    %v258 = vmul.f32 1.0, %v257
    %v259 = vtanh.pop %v252
    %v260 = vmul.f32 %v258, 0.0
    %262 = vrot.lane.b32.xlu0 %v259, 32
    %v263 = vpop.permute.xlu0 %262
    %v265 = vmul.f32 %v258, %v263
    %267 = vrot.lane.b32.xlu0 %v265, 32
    %v268 = vpop.permute.xlu0 %267
    %v270 = vadd.f32 %v260, %v268
    %v271 = vtanh.pop %v270
    %273 = vrot.lane.b32.xlu0 %v271, 32
    %v274 = vpop.permute.xlu0 %273
    %v276 = vmul.f32 %v258, %v274
    %v277 = vld [vmem:[%s1] sm:$0xff]
    %279 = vrot.lane.b32.xlu0 %v276, 64
    %v280 = vpop.permute.xlu0 %279
    %v282 = vmul.f32 %v277, %v280
    %v283 = vadd.f32 %v282, 0.0
    %285 = vrot.lane.b32.xlu0 %v270, 96
    %v286 = vpop.permute.xlu0 %285
    %v288 = vmul.f32 %v277, %v286
    %v289 = vadd.f32 %v288, 0.0
    %v291 = vsel %vm178, %v283, 0
    %293 = vmatprep.subr.mxu0 0.0
    %294 = vmatpush1.msra.mxu0 %v174
    %295 = vmatprep.subr.mxu0 0.0
    %296 = vmatpush1.msra.mxu0 %v175
    %297 = vmatprep.subr.mxu0 0.0
    %298 = vmatpush1.msra.mxu0 %v176
    %299 = vmatprep.subr.mxu0 0.0
    %300 = vmatpush1.msra.mxu0 %v177
    %301 = vmatprep.subr.mxu0 0.0
    %302 = vmatpush1.msra.mxu0 0.0
    %303 = vmatprep.subr.mxu0 0.0
    %304 = vmatpush1.msra.mxu0 0.0
    %305 = vmatprep.subr.mxu0 0.0
    %306 = vmatpush1.msra.mxu0 0.0
    %307 = vmatprep.subr.mxu0 0.0
    %308 = vmatpush1.msra.mxu0 0.0
    %309 = vmatprep.subr.mxu0 0.0
    %310 = vmatpush1.msra.mxu0 0.0
    %311 = vmatprep.subr.mxu0 0.0
    %312 = vmatpush1.msra.mxu0 0.0
    %313 = vmatprep.subr.mxu0 0.0
    %314 = vmatpush1.msra.mxu0 0.0
    %315 = vmatprep.subr.mxu0 0.0
    %316 = vmatpush1.msra.mxu0 0.0
    %317 = vmatprep.subr.mxu0 0.0
    %318 = vmatpush1.msra.mxu0 0.0
    %319 = vmatprep.subr.mxu0 0.0
    %320 = vmatpush1.msra.mxu0 0.0
    %321 = vmatprep.subr.mxu0 0.0
    %322 = vmatpush1.msra.mxu0 0.0
    %323 = vmatprep.subr.mxu0 0.0
    %324 = vmatpush1.msra.mxu0 0.0
    %325 = vmatprep.subr.mxu0 0.0
    %326 = vmatpush1.msra.mxu0 0.0
    %327 = vmatprep.subr.mxu0 0.0
    %328 = vmatpush1.msra.mxu0 0.0
    %329 = vmatprep.subr.mxu0 0.0
    %330 = vmatpush1.msra.mxu0 0.0
    %331 = vmatprep.subr.mxu0 0.0
    %332 = vmatpush1.msra.mxu0 0.0
    %333 = vmatprep.subr.mxu0 0.0
    %334 = vmatpush1.msra.mxu0 0.0
    %335 = vmatprep.subr.mxu0 0.0
    %336 = vmatpush1.msra.mxu0 0.0
    %337 = vmatprep.subr.mxu0 0.0
    %338 = vmatpush1.msra.mxu0 0.0
    %339 = vmatprep.subr.mxu0 0.0
    %340 = vmatpush1.msra.mxu0 0.0
    %341 = vmatprep.subr.mxu0 0.0
    %342 = vmatpush1.msra.mxu0 0.0
    %343 = vmatprep.subr.mxu0 0.0
    %344 = vmatpush1.msra.mxu0 0.0
    %345 = vmatprep.subr.mxu0 0.0
    %346 = vmatpush1.msra.mxu0 0.0
    %347 = vmatprep.subr.mxu0 0.0
    %348 = vmatpush1.msra.mxu0 0.0
    %349 = vmatprep.subr.mxu0 0.0
    %350 = vmatpush1.msra.mxu0 0.0
    %351 = vmatprep.subr.mxu0 0.0
    %352 = vmatpush1.msra.mxu0 0.0
    %353 = vmatprep.subr.mxu0 0.0
    %354 = vmatpush1.msra.mxu0 0.0
    %355 = vmatprep.subr.mxu0 0.0
    %356 = vmatpush1.msra.mxu0 0.0
    %357 = vmatprep.mubr.f32.mxu0 0.0
    %358 = vmatmul.mubr.f32.gmra.mrb[0].mxu0 %v291
    %v359 = vpop.f32.mrb[0].mxu0
    %v360 = vadd.f32 0.0, %v359
    %v361 = vpop.f32.mrb[0].mxu0
    %362 = vdwg.mxu0
    %v363 = vadd.f32 %v141, %v360
    %v364 = vxor.u32 %v363, 2147483648
    %v365 = vmul.f32 %v364, 1.442695
    %v366 = vpow.pop %v365
    %v367 = vadd.f32 %v366, 1.0
    %v368 = vrcp.pop %v367
    %v369 = vmul.f32 1.0, %v368
    %v370 = vtanh.pop %v363
    %372 = vrot.lane.b32.xlu0 %v289, 32
    %v373 = vpop.permute.xlu0 %372
    %v375 = vmul.f32 %v369, %v373
    %377 = vrot.lane.b32.xlu0 %v370, 32
    %v378 = vpop.permute.xlu0 %377
    %v380 = vmul.f32 %v369, %v378
    %382 = vrot.lane.b32.xlu0 %v380, 32
    %v383 = vpop.permute.xlu0 %382
    %v385 = vadd.f32 %v375, %v383
    %v386 = vtanh.pop %v385
    %388 = vrot.lane.b32.xlu0 %v386, 32
    %v389 = vpop.permute.xlu0 %388
    %v391 = vmul.f32 %v369, %v389
    %v392 = vld [vmem:[%s1 + $0x8] sm:$0xff]
    %393 = vrot.lane.b32.xlu0 %v283, 64
    %v394 = vpop.permute.xlu0 %393
    %v396 = vsub.f32 %v391, %v394
    %398 = vrot.lane.b32.xlu0 %v396, 64
    %v399 = vpop.permute.xlu0 %398
    %v401 = vmul.f32 %v392, %v399
    %v402 = vadd.f32 %v283, %v401
    %v403 = vsub.f32 %v385, %v373
    %405 = vrot.lane.b32.xlu0 %v403, 96
    %v406 = vpop.permute.xlu0 %405
    %v408 = vmul.f32 %v392, %v406
    %v409 = vadd.f32 %v289, %v408
    %411 = vrot.lane.b32.xlu0 %v391, 64
    %v412 = vpop.permute.xlu0 %411
    %v414 = vmul.f32 %v392, %v412
    %v416 = vsel %vm178, %v402, 0
    %418 = vmatprep.subr.mxu0 0.0
    %419 = vmatpush1.msra.mxu0 %v174
    %420 = vmatprep.subr.mxu0 0.0
    %421 = vmatpush1.msra.mxu0 %v175
    %422 = vmatprep.subr.mxu0 0.0
    %423 = vmatpush1.msra.mxu0 %v176
    %424 = vmatprep.subr.mxu0 0.0
    %425 = vmatpush1.msra.mxu0 %v177
    %426 = vmatprep.subr.mxu0 0.0
    %427 = vmatpush1.msra.mxu0 0.0
    %428 = vmatprep.subr.mxu0 0.0
    %429 = vmatpush1.msra.mxu0 0.0
    %430 = vmatprep.subr.mxu0 0.0
    %431 = vmatpush1.msra.mxu0 0.0
    %432 = vmatprep.subr.mxu0 0.0
    %433 = vmatpush1.msra.mxu0 0.0
    %434 = vmatprep.subr.mxu0 0.0
    %435 = vmatpush1.msra.mxu0 0.0
    %436 = vmatprep.subr.mxu0 0.0
    %437 = vmatpush1.msra.mxu0 0.0
    %438 = vmatprep.subr.mxu0 0.0
    %439 = vmatpush1.msra.mxu0 0.0
    %440 = vmatprep.subr.mxu0 0.0
    %441 = vmatpush1.msra.mxu0 0.0
    %442 = vmatprep.subr.mxu0 0.0
    %443 = vmatpush1.msra.mxu0 0.0
    %444 = vmatprep.subr.mxu0 0.0
    %445 = vmatpush1.msra.mxu0 0.0
    %446 = vmatprep.subr.mxu0 0.0
    %447 = vmatpush1.msra.mxu0 0.0
    %448 = vmatprep.subr.mxu0 0.0
    %449 = vmatpush1.msra.mxu0 0.0
    %450 = vmatprep.subr.mxu0 0.0
    %451 = vmatpush1.msra.mxu0 0.0
    %452 = vmatprep.subr.mxu0 0.0
    %453 = vmatpush1.msra.mxu0 0.0
    %454 = vmatprep.subr.mxu0 0.0
    %455 = vmatpush1.msra.mxu0 0.0
    %456 = vmatprep.subr.mxu0 0.0
    %457 = vmatpush1.msra.mxu0 0.0
    %458 = vmatprep.subr.mxu0 0.0
    %459 = vmatpush1.msra.mxu0 0.0
    %460 = vmatprep.subr.mxu0 0.0
    %461 = vmatpush1.msra.mxu0 0.0
    %462 = vmatprep.subr.mxu0 0.0
    %463 = vmatpush1.msra.mxu0 0.0
    %464 = vmatprep.subr.mxu0 0.0
    %465 = vmatpush1.msra.mxu0 0.0
    %466 = vmatprep.subr.mxu0 0.0
    %467 = vmatpush1.msra.mxu0 0.0
    %468 = vmatprep.subr.mxu0 0.0
    %469 = vmatpush1.msra.mxu0 0.0
    %470 = vmatprep.subr.mxu0 0.0
    %471 = vmatpush1.msra.mxu0 0.0
    %472 = vmatprep.subr.mxu0 0.0
    %473 = vmatpush1.msra.mxu0 0.0
    %474 = vmatprep.subr.mxu0 0.0
    %475 = vmatpush1.msra.mxu0 0.0
    %476 = vmatprep.subr.mxu0 0.0
    %477 = vmatpush1.msra.mxu0 0.0
    %478 = vmatprep.subr.mxu0 0.0
    %479 = vmatpush1.msra.mxu0 0.0
    %480 = vmatprep.subr.mxu0 0.0
    %481 = vmatpush1.msra.mxu0 0.0
    %482 = vmatprep.mubr.f32.mxu0 0.0
    %483 = vmatmul.mubr.f32.gmra.mrb[0].mxu0 %v416
    %v484 = vpop.f32.mrb[0].mxu0
    %v485 = vadd.f32 0.0, %v484
    %v486 = vpop.f32.mrb[0].mxu0
    %487 = vdwg.mxu0
    %v488 = vadd.f32 %v146, %v485
    %v489 = vxor.u32 %v488, 2147483648
    %v490 = vmul.f32 %v489, 1.442695
    %v491 = vpow.pop %v490
    %v492 = vadd.f32 %v491, 1.0
    %v493 = vrcp.pop %v492
    %v494 = vmul.f32 1.0, %v493
    %v495 = vtanh.pop %v488
    %497 = vrot.lane.b32.xlu0 %v409, 32
    %v498 = vpop.permute.xlu0 %497
    %v500 = vmul.f32 %v494, %v498
    %502 = vrot.lane.b32.xlu0 %v495, 32
    %v503 = vpop.permute.xlu0 %502
    %v505 = vmul.f32 %v494, %v503
    %507 = vrot.lane.b32.xlu0 %v505, 32
    %v508 = vpop.permute.xlu0 %507
    %v510 = vadd.f32 %v500, %v508
    %v511 = vtanh.pop %v510
    %513 = vrot.lane.b32.xlu0 %v511, 32
    %v514 = vpop.permute.xlu0 %513
    %v516 = vmul.f32 %v494, %v514
    %v517 = vld [vmem:[%s1 + $0x10] sm:$0xff]
    %518 = vrot.lane.b32.xlu0 %v402, 64
    %v519 = vpop.permute.xlu0 %518
    %v521 = vsub.f32 %v516, %v519
    %523 = vrot.lane.b32.xlu0 %v521, 64
    %v524 = vpop.permute.xlu0 %523
    %v526 = vmul.f32 %v517, %v524
    %v527 = vadd.f32 %v402, %v526
    %v528 = vsub.f32 %v510, %v498
    %530 = vrot.lane.b32.xlu0 %v528, 96
    %v531 = vpop.permute.xlu0 %530
    %v533 = vmul.f32 %v517, %v531
    %v534 = vadd.f32 %v409, %v533
    %536 = vrot.lane.b32.xlu0 %v516, 64
    %v537 = vpop.permute.xlu0 %536
    %v539 = vmul.f32 %v517, %v537
    %v541 = vsel %vm178, %v527, 0
    %543 = vmatprep.subr.mxu0 0.0
    %544 = vmatpush1.msra.mxu0 %v174
    %545 = vmatprep.subr.mxu0 0.0
    %546 = vmatpush1.msra.mxu0 %v175
    %547 = vmatprep.subr.mxu0 0.0
    %548 = vmatpush1.msra.mxu0 %v176
    %549 = vmatprep.subr.mxu0 0.0
    %550 = vmatpush1.msra.mxu0 %v177
    %551 = vmatprep.subr.mxu0 0.0
    %552 = vmatpush1.msra.mxu0 0.0
    %553 = vmatprep.subr.mxu0 0.0
    %554 = vmatpush1.msra.mxu0 0.0
    %555 = vmatprep.subr.mxu0 0.0
    %556 = vmatpush1.msra.mxu0 0.0
    %557 = vmatprep.subr.mxu0 0.0
    %558 = vmatpush1.msra.mxu0 0.0
    %559 = vmatprep.subr.mxu0 0.0
    %560 = vmatpush1.msra.mxu0 0.0
    %561 = vmatprep.subr.mxu0 0.0
    %562 = vmatpush1.msra.mxu0 0.0
    %563 = vmatprep.subr.mxu0 0.0
    %564 = vmatpush1.msra.mxu0 0.0
    %565 = vmatprep.subr.mxu0 0.0
    %566 = vmatpush1.msra.mxu0 0.0
    %567 = vmatprep.subr.mxu0 0.0
    %568 = vmatpush1.msra.mxu0 0.0
    %569 = vmatprep.subr.mxu0 0.0
    %570 = vmatpush1.msra.mxu0 0.0
    %571 = vmatprep.subr.mxu0 0.0
    %572 = vmatpush1.msra.mxu0 0.0
    %573 = vmatprep.subr.mxu0 0.0
    %574 = vmatpush1.msra.mxu0 0.0
    %575 = vmatprep.subr.mxu0 0.0
    %576 = vmatpush1.msra.mxu0 0.0
    %577 = vmatprep.subr.mxu0 0.0
    %578 = vmatpush1.msra.mxu0 0.0
    %579 = vmatprep.subr.mxu0 0.0
    %580 = vmatpush1.msra.mxu0 0.0
    %581 = vmatprep.subr.mxu0 0.0
    %582 = vmatpush1.msra.mxu0 0.0
    %583 = vmatprep.subr.mxu0 0.0
    %584 = vmatpush1.msra.mxu0 0.0
    %585 = vmatprep.subr.mxu0 0.0
    %586 = vmatpush1.msra.mxu0 0.0
    %587 = vmatprep.subr.mxu0 0.0
    %588 = vmatpush1.msra.mxu0 0.0
    %589 = vmatprep.subr.mxu0 0.0
    %590 = vmatpush1.msra.mxu0 0.0
    %591 = vmatprep.subr.mxu0 0.0
    %592 = vmatpush1.msra.mxu0 0.0
    %593 = vmatprep.subr.mxu0 0.0
    %594 = vmatpush1.msra.mxu0 0.0
    %595 = vmatprep.subr.mxu0 0.0
    %596 = vmatpush1.msra.mxu0 0.0
    %597 = vmatprep.subr.mxu0 0.0
    %598 = vmatpush1.msra.mxu0 0.0
    %599 = vmatprep.subr.mxu0 0.0
    %600 = vmatpush1.msra.mxu0 0.0
    %601 = vmatprep.subr.mxu0 0.0
    %602 = vmatpush1.msra.mxu0 0.0
    %603 = vmatprep.subr.mxu0 0.0
    %604 = vmatpush1.msra.mxu0 0.0
    %605 = vmatprep.subr.mxu0 0.0
    %606 = vmatpush1.msra.mxu0 0.0
    %607 = vmatprep.mubr.f32.mxu0 0.0
    %608 = vmatmul.mubr.f32.gmra.mrb[0].mxu0 %v541
    %v609 = vpop.f32.mrb[0].mxu0
    %v610 = vadd.f32 0.0, %v609
    %v611 = vpop.f32.mrb[0].mxu0
    %612 = vdwg.mxu0
    %v613 = vadd.f32 %v151, %v610
    %v614 = vxor.u32 %v613, 2147483648
    %v615 = vmul.f32 %v614, 1.442695
    %v616 = vpow.pop %v615
    %v617 = vadd.f32 %v616, 1.0
    %v618 = vrcp.pop %v617
    %v619 = vmul.f32 1.0, %v618
    %v620 = vtanh.pop %v613
    %622 = vrot.lane.b32.xlu0 %v534, 32
    %v623 = vpop.permute.xlu0 %622
    %v625 = vmul.f32 %v619, %v623
    %627 = vrot.lane.b32.xlu0 %v620, 32
    %v628 = vpop.permute.xlu0 %627
    %v630 = vmul.f32 %v619, %v628
    %632 = vrot.lane.b32.xlu0 %v630, 32
    %v633 = vpop.permute.xlu0 %632
    %v635 = vadd.f32 %v625, %v633
    %v636 = vtanh.pop %v635
    %638 = vrot.lane.b32.xlu0 %v636, 32
    %v639 = vpop.permute.xlu0 %638
    %v641 = vmul.f32 %v619, %v639
    %v642 = vld [vmem:[%s1 + $0x18] sm:$0xff]
    %643 = vrot.lane.b32.xlu0 %v527, 64
    %v644 = vpop.permute.xlu0 %643
    %v646 = vsub.f32 %v641, %v644
    %648 = vrot.lane.b32.xlu0 %v646, 64
    %v649 = vpop.permute.xlu0 %648
    %v651 = vmul.f32 %v642, %v649
    %v652 = vadd.f32 %v527, %v651
    %v653 = vsub.f32 %v635, %v623
    %655 = vrot.lane.b32.xlu0 %v653, 96
    %v656 = vpop.permute.xlu0 %655
    %v658 = vmul.f32 %v642, %v656
    %v659 = vadd.f32 %v534, %v658
    %661 = vrot.lane.b32.xlu0 %v641, 64
    %v662 = vpop.permute.xlu0 %661
    %v664 = vmul.f32 %v642, %v662
    %v666 = vsel %vm178, %v652, 0
    %668 = vmatprep.subr.mxu0 0.0
    %669 = vmatpush1.msra.mxu0 %v174
    %670 = vmatprep.subr.mxu0 0.0
    %671 = vmatpush1.msra.mxu0 %v175
    %672 = vmatprep.subr.mxu0 0.0
    %673 = vmatpush1.msra.mxu0 %v176
    %674 = vmatprep.subr.mxu0 0.0
    %675 = vmatpush1.msra.mxu0 %v177
    %676 = vmatprep.subr.mxu0 0.0
    %677 = vmatpush1.msra.mxu0 0.0
    %678 = vmatprep.subr.mxu0 0.0
    %679 = vmatpush1.msra.mxu0 0.0
    %680 = vmatprep.subr.mxu0 0.0
    %681 = vmatpush1.msra.mxu0 0.0
    %682 = vmatprep.subr.mxu0 0.0
    %683 = vmatpush1.msra.mxu0 0.0
    %684 = vmatprep.subr.mxu0 0.0
    %685 = vmatpush1.msra.mxu0 0.0
    %686 = vmatprep.subr.mxu0 0.0
    %687 = vmatpush1.msra.mxu0 0.0
    %688 = vmatprep.subr.mxu0 0.0
    %689 = vmatpush1.msra.mxu0 0.0
    %690 = vmatprep.subr.mxu0 0.0
    %691 = vmatpush1.msra.mxu0 0.0
    %692 = vmatprep.subr.mxu0 0.0
    %693 = vmatpush1.msra.mxu0 0.0
    %694 = vmatprep.subr.mxu0 0.0
    %695 = vmatpush1.msra.mxu0 0.0
    %696 = vmatprep.subr.mxu0 0.0
    %697 = vmatpush1.msra.mxu0 0.0
    %698 = vmatprep.subr.mxu0 0.0
    %699 = vmatpush1.msra.mxu0 0.0
    %700 = vmatprep.subr.mxu0 0.0
    %701 = vmatpush1.msra.mxu0 0.0
    %702 = vmatprep.subr.mxu0 0.0
    %703 = vmatpush1.msra.mxu0 0.0
    %704 = vmatprep.subr.mxu0 0.0
    %705 = vmatpush1.msra.mxu0 0.0
    %706 = vmatprep.subr.mxu0 0.0
    %707 = vmatpush1.msra.mxu0 0.0
    %708 = vmatprep.subr.mxu0 0.0
    %709 = vmatpush1.msra.mxu0 0.0
    %710 = vmatprep.subr.mxu0 0.0
    %711 = vmatpush1.msra.mxu0 0.0
    %712 = vmatprep.subr.mxu0 0.0
    %713 = vmatpush1.msra.mxu0 0.0
    %714 = vmatprep.subr.mxu0 0.0
    %715 = vmatpush1.msra.mxu0 0.0
    %716 = vmatprep.subr.mxu0 0.0
    %717 = vmatpush1.msra.mxu0 0.0
    %718 = vmatprep.subr.mxu0 0.0
    %719 = vmatpush1.msra.mxu0 0.0
    %720 = vmatprep.subr.mxu0 0.0
    %721 = vmatpush1.msra.mxu0 0.0
    %722 = vmatprep.subr.mxu0 0.0
    %723 = vmatpush1.msra.mxu0 0.0
    %724 = vmatprep.subr.mxu0 0.0
    %725 = vmatpush1.msra.mxu0 0.0
    %726 = vmatprep.subr.mxu0 0.0
    %727 = vmatpush1.msra.mxu0 0.0
    %728 = vmatprep.subr.mxu0 0.0
    %729 = vmatpush1.msra.mxu0 0.0
    %730 = vmatprep.subr.mxu0 0.0
    %731 = vmatpush1.msra.mxu0 0.0
    %732 = vmatprep.mubr.f32.mxu0 0.0
    %733 = vmatmul.mubr.f32.gmra.mrb[0].mxu0 %v666
    %v734 = vpop.f32.mrb[0].mxu0
    %v735 = vadd.f32 0.0, %v734
    %v736 = vpop.f32.mrb[0].mxu0
    %737 = vdwg.mxu0
    %v738 = vadd.f32 %v156, %v735
    %v739 = vxor.u32 %v738, 2147483648
    %v740 = vmul.f32 %v739, 1.442695
    %v741 = vpow.pop %v740
    %v742 = vadd.f32 %v741, 1.0
    %v743 = vrcp.pop %v742
    %v744 = vmul.f32 1.0, %v743
    %v745 = vtanh.pop %v738
    %747 = vrot.lane.b32.xlu0 %v659, 32
    %v748 = vpop.permute.xlu0 %747
    %v750 = vmul.f32 %v744, %v748
    %752 = vrot.lane.b32.xlu0 %v745, 32
    %v753 = vpop.permute.xlu0 %752
    %v755 = vmul.f32 %v744, %v753
    %757 = vrot.lane.b32.xlu0 %v755, 32
    %v758 = vpop.permute.xlu0 %757
    %v760 = vadd.f32 %v750, %v758
    %v761 = vtanh.pop %v760
    %763 = vrot.lane.b32.xlu0 %v761, 32
    %v764 = vpop.permute.xlu0 %763
    %v766 = vmul.f32 %v744, %v764
    %v767 = vld [vmem:[%s1 + $0x20] sm:$0xff]
    %768 = vrot.lane.b32.xlu0 %v652, 64
    %v769 = vpop.permute.xlu0 %768
    %v771 = vsub.f32 %v766, %v769
    %773 = vrot.lane.b32.xlu0 %v771, 64
    %v774 = vpop.permute.xlu0 %773
    %v776 = vmul.f32 %v767, %v774
    %v777 = vadd.f32 %v652, %v776
    %v778 = vsub.f32 %v760, %v748
    %780 = vrot.lane.b32.xlu0 %v778, 96
    %v781 = vpop.permute.xlu0 %780
    %v783 = vmul.f32 %v767, %v781
    %v784 = vadd.f32 %v659, %v783
    %786 = vrot.lane.b32.xlu0 %v766, 64
    %v787 = vpop.permute.xlu0 %786
    %v789 = vmul.f32 %v767, %v787
    %v791 = vsel %vm178, %v777, 0
    %793 = vmatprep.subr.mxu0 0.0
    %794 = vmatpush1.msra.mxu0 %v174
    %795 = vmatprep.subr.mxu0 0.0
    %796 = vmatpush1.msra.mxu0 %v175
    %797 = vmatprep.subr.mxu0 0.0
    %798 = vmatpush1.msra.mxu0 %v176
    %799 = vmatprep.subr.mxu0 0.0
    %800 = vmatpush1.msra.mxu0 %v177
    %801 = vmatprep.subr.mxu0 0.0
    %802 = vmatpush1.msra.mxu0 0.0
    %803 = vmatprep.subr.mxu0 0.0
    %804 = vmatpush1.msra.mxu0 0.0
    %805 = vmatprep.subr.mxu0 0.0
    %806 = vmatpush1.msra.mxu0 0.0
    %807 = vmatprep.subr.mxu0 0.0
    %808 = vmatpush1.msra.mxu0 0.0
    %809 = vmatprep.subr.mxu0 0.0
    %810 = vmatpush1.msra.mxu0 0.0
    %811 = vmatprep.subr.mxu0 0.0
    %812 = vmatpush1.msra.mxu0 0.0
    %813 = vmatprep.subr.mxu0 0.0
    %814 = vmatpush1.msra.mxu0 0.0
    %815 = vmatprep.subr.mxu0 0.0
    %816 = vmatpush1.msra.mxu0 0.0
    %817 = vmatprep.subr.mxu0 0.0
    %818 = vmatpush1.msra.mxu0 0.0
    %819 = vmatprep.subr.mxu0 0.0
    %820 = vmatpush1.msra.mxu0 0.0
    %821 = vmatprep.subr.mxu0 0.0
    %822 = vmatpush1.msra.mxu0 0.0
    %823 = vmatprep.subr.mxu0 0.0
    %824 = vmatpush1.msra.mxu0 0.0
    %825 = vmatprep.subr.mxu0 0.0
    %826 = vmatpush1.msra.mxu0 0.0
    %827 = vmatprep.subr.mxu0 0.0
    %828 = vmatpush1.msra.mxu0 0.0
    %829 = vmatprep.subr.mxu0 0.0
    %830 = vmatpush1.msra.mxu0 0.0
    %831 = vmatprep.subr.mxu0 0.0
    %832 = vmatpush1.msra.mxu0 0.0
    %833 = vmatprep.subr.mxu0 0.0
    %834 = vmatpush1.msra.mxu0 0.0
    %835 = vmatprep.subr.mxu0 0.0
    %836 = vmatpush1.msra.mxu0 0.0
    %837 = vmatprep.subr.mxu0 0.0
    %838 = vmatpush1.msra.mxu0 0.0
    %839 = vmatprep.subr.mxu0 0.0
    %840 = vmatpush1.msra.mxu0 0.0
    %841 = vmatprep.subr.mxu0 0.0
    %842 = vmatpush1.msra.mxu0 0.0
    %843 = vmatprep.subr.mxu0 0.0
    %844 = vmatpush1.msra.mxu0 0.0
    %845 = vmatprep.subr.mxu0 0.0
    %846 = vmatpush1.msra.mxu0 0.0
    %847 = vmatprep.subr.mxu0 0.0
    %848 = vmatpush1.msra.mxu0 0.0
    %849 = vmatprep.subr.mxu0 0.0
    %850 = vmatpush1.msra.mxu0 0.0
    %851 = vmatprep.subr.mxu0 0.0
    %852 = vmatpush1.msra.mxu0 0.0
    %853 = vmatprep.subr.mxu0 0.0
    %854 = vmatpush1.msra.mxu0 0.0
    %855 = vmatprep.subr.mxu0 0.0
    %856 = vmatpush1.msra.mxu0 0.0
    %857 = vmatprep.mubr.f32.mxu0 0.0
    %858 = vmatmul.mubr.f32.gmra.mrb[0].mxu0 %v791
    %v859 = vpop.f32.mrb[0].mxu0
    %v860 = vadd.f32 0.0, %v859
    %v861 = vpop.f32.mrb[0].mxu0
    %862 = vdwg.mxu0
    %v863 = vadd.f32 %v161, %v860
    %v864 = vxor.u32 %v863, 2147483648
    %v865 = vmul.f32 %v864, 1.442695
    %v866 = vpow.pop %v865
    %v867 = vadd.f32 %v866, 1.0
    %v868 = vrcp.pop %v867
    %v869 = vmul.f32 1.0, %v868
    %v870 = vtanh.pop %v863
    %872 = vrot.lane.b32.xlu0 %v784, 32
    %v873 = vpop.permute.xlu0 %872
    %v875 = vmul.f32 %v869, %v873
    %877 = vrot.lane.b32.xlu0 %v870, 32
    %v878 = vpop.permute.xlu0 %877
    %v880 = vmul.f32 %v869, %v878
    %882 = vrot.lane.b32.xlu0 %v880, 32
    %v883 = vpop.permute.xlu0 %882
    %v885 = vadd.f32 %v875, %v883
    %v886 = vtanh.pop %v885
    %888 = vrot.lane.b32.xlu0 %v886, 32
    %v889 = vpop.permute.xlu0 %888
    %v891 = vmul.f32 %v869, %v889
    %v892 = vld [vmem:[%s1 + $0x28] sm:$0xff]
    %893 = vrot.lane.b32.xlu0 %v777, 64
    %v894 = vpop.permute.xlu0 %893
    %v896 = vsub.f32 %v891, %v894
    %898 = vrot.lane.b32.xlu0 %v896, 64
    %v899 = vpop.permute.xlu0 %898
    %v901 = vmul.f32 %v892, %v899
    %v902 = vadd.f32 %v777, %v901
    %v903 = vsub.f32 %v885, %v873
    %905 = vrot.lane.b32.xlu0 %v903, 96
    %v906 = vpop.permute.xlu0 %905
    %v908 = vmul.f32 %v892, %v906
    %v909 = vadd.f32 %v784, %v908
    %911 = vrot.lane.b32.xlu0 %v891, 64
    %v912 = vpop.permute.xlu0 %911
    %v914 = vmul.f32 %v892, %v912
    %v916 = vsel %vm178, %v902, 0
    %918 = vmatprep.subr.mxu0 0.0
    %919 = vmatpush1.msra.mxu0 %v174
    %920 = vmatprep.subr.mxu0 0.0
    %921 = vmatpush1.msra.mxu0 %v175
    %922 = vmatprep.subr.mxu0 0.0
    %923 = vmatpush1.msra.mxu0 %v176
    %924 = vmatprep.subr.mxu0 0.0
    %925 = vmatpush1.msra.mxu0 %v177
    %926 = vmatprep.subr.mxu0 0.0
    %927 = vmatpush1.msra.mxu0 0.0
    %928 = vmatprep.subr.mxu0 0.0
    %929 = vmatpush1.msra.mxu0 0.0
    %930 = vmatprep.subr.mxu0 0.0
    %931 = vmatpush1.msra.mxu0 0.0
    %932 = vmatprep.subr.mxu0 0.0
    %933 = vmatpush1.msra.mxu0 0.0
    %934 = vmatprep.subr.mxu0 0.0
    %935 = vmatpush1.msra.mxu0 0.0
    %936 = vmatprep.subr.mxu0 0.0
    %937 = vmatpush1.msra.mxu0 0.0
    %938 = vmatprep.subr.mxu0 0.0
    %939 = vmatpush1.msra.mxu0 0.0
    %940 = vmatprep.subr.mxu0 0.0
    %941 = vmatpush1.msra.mxu0 0.0
    %942 = vmatprep.subr.mxu0 0.0
    %943 = vmatpush1.msra.mxu0 0.0
    %944 = vmatprep.subr.mxu0 0.0
    %945 = vmatpush1.msra.mxu0 0.0
    %946 = vmatprep.subr.mxu0 0.0
    %947 = vmatpush1.msra.mxu0 0.0
    %948 = vmatprep.subr.mxu0 0.0
    %949 = vmatpush1.msra.mxu0 0.0
    %950 = vmatprep.subr.mxu0 0.0
    %951 = vmatpush1.msra.mxu0 0.0
    %952 = vmatprep.subr.mxu0 0.0
    %953 = vmatpush1.msra.mxu0 0.0
    %954 = vmatprep.subr.mxu0 0.0
    %955 = vmatpush1.msra.mxu0 0.0
    %956 = vmatprep.subr.mxu0 0.0
    %957 = vmatpush1.msra.mxu0 0.0
    %958 = vmatprep.subr.mxu0 0.0
    %959 = vmatpush1.msra.mxu0 0.0
    %960 = vmatprep.subr.mxu0 0.0
    %961 = vmatpush1.msra.mxu0 0.0
    %962 = vmatprep.subr.mxu0 0.0
    %963 = vmatpush1.msra.mxu0 0.0
    %964 = vmatprep.subr.mxu0 0.0
    %965 = vmatpush1.msra.mxu0 0.0
    %966 = vmatprep.subr.mxu0 0.0
    %967 = vmatpush1.msra.mxu0 0.0
    %968 = vmatprep.subr.mxu0 0.0
    %969 = vmatpush1.msra.mxu0 0.0
    %970 = vmatprep.subr.mxu0 0.0
    %971 = vmatpush1.msra.mxu0 0.0
    %972 = vmatprep.subr.mxu0 0.0
    %973 = vmatpush1.msra.mxu0 0.0
    %974 = vmatprep.subr.mxu0 0.0
    %975 = vmatpush1.msra.mxu0 0.0
    %976 = vmatprep.subr.mxu0 0.0
    %977 = vmatpush1.msra.mxu0 0.0
    %978 = vmatprep.subr.mxu0 0.0
    %979 = vmatpush1.msra.mxu0 0.0
    %980 = vmatprep.subr.mxu0 0.0
    %981 = vmatpush1.msra.mxu0 0.0
    %982 = vmatprep.mubr.f32.mxu0 0.0
    %983 = vmatmul.mubr.f32.gmra.mrb[0].mxu0 %v916
    %v984 = vpop.f32.mrb[0].mxu0
    %v985 = vadd.f32 0.0, %v984
    %v986 = vpop.f32.mrb[0].mxu0
    %987 = vdwg.mxu0
    %v988 = vadd.f32 %v166, %v985
    %v989 = vxor.u32 %v988, 2147483648
    %v990 = vmul.f32 %v989, 1.442695
    %v991 = vpow.pop %v990
    %v992 = vadd.f32 %v991, 1.0
    %v993 = vrcp.pop %v992
    %v994 = vmul.f32 1.0, %v993
    %v995 = vtanh.pop %v988
    %997 = vrot.lane.b32.xlu0 %v909, 32
    %v998 = vpop.permute.xlu0 %997
    %v1000 = vmul.f32 %v994, %v998
    %1002 = vrot.lane.b32.xlu0 %v995, 32
    %v1003 = vpop.permute.xlu0 %1002
    %v1005 = vmul.f32 %v994, %v1003
    %1007 = vrot.lane.b32.xlu0 %v1005, 32
    %v1008 = vpop.permute.xlu0 %1007
    %v1010 = vadd.f32 %v1000, %v1008
    %v1011 = vtanh.pop %v1010
    %1013 = vrot.lane.b32.xlu0 %v1011, 32
    %v1014 = vpop.permute.xlu0 %1013
    %v1016 = vmul.f32 %v994, %v1014
    %v1017 = vld [vmem:[%s1 + $0x30] sm:$0xff]
    %1018 = vrot.lane.b32.xlu0 %v902, 64
    %v1019 = vpop.permute.xlu0 %1018
    %v1021 = vsub.f32 %v1016, %v1019
    %1023 = vrot.lane.b32.xlu0 %v1021, 64
    %v1024 = vpop.permute.xlu0 %1023
    %v1026 = vmul.f32 %v1017, %v1024
    %v1027 = vadd.f32 %v902, %v1026
    %v1028 = vsub.f32 %v1010, %v998
    %1030 = vrot.lane.b32.xlu0 %v1028, 96
    %v1031 = vpop.permute.xlu0 %1030
    %v1033 = vmul.f32 %v1017, %v1031
    %v1034 = vadd.f32 %v909, %v1033
    %1036 = vrot.lane.b32.xlu0 %v1016, 64
    %v1037 = vpop.permute.xlu0 %1036
    %v1039 = vmul.f32 %v1017, %v1037
    %v1041 = vsel %vm178, %v1027, 0
    %1043 = vmatprep.subr.mxu0 0.0
    %1044 = vmatpush1.msra.mxu0 %v174
    %1045 = vmatprep.subr.mxu0 0.0
    %1046 = vmatpush1.msra.mxu0 %v175
    %1047 = vmatprep.subr.mxu0 0.0
    %1048 = vmatpush1.msra.mxu0 %v176
    %1049 = vmatprep.subr.mxu0 0.0
    %1050 = vmatpush1.msra.mxu0 %v177
    %1051 = vmatprep.subr.mxu0 0.0
    %1052 = vmatpush1.msra.mxu0 0.0
    %1053 = vmatprep.subr.mxu0 0.0
    %1054 = vmatpush1.msra.mxu0 0.0
    %1055 = vmatprep.subr.mxu0 0.0
    %1056 = vmatpush1.msra.mxu0 0.0
    %1057 = vmatprep.subr.mxu0 0.0
    %1058 = vmatpush1.msra.mxu0 0.0
    %1059 = vmatprep.subr.mxu0 0.0
    %1060 = vmatpush1.msra.mxu0 0.0
    %1061 = vmatprep.subr.mxu0 0.0
    %1062 = vmatpush1.msra.mxu0 0.0
    %1063 = vmatprep.subr.mxu0 0.0
    %1064 = vmatpush1.msra.mxu0 0.0
    %1065 = vmatprep.subr.mxu0 0.0
    %1066 = vmatpush1.msra.mxu0 0.0
    %1067 = vmatprep.subr.mxu0 0.0
    %1068 = vmatpush1.msra.mxu0 0.0
    %1069 = vmatprep.subr.mxu0 0.0
    %1070 = vmatpush1.msra.mxu0 0.0
    %1071 = vmatprep.subr.mxu0 0.0
    %1072 = vmatpush1.msra.mxu0 0.0
    %1073 = vmatprep.subr.mxu0 0.0
    %1074 = vmatpush1.msra.mxu0 0.0
    %1075 = vmatprep.subr.mxu0 0.0
    %1076 = vmatpush1.msra.mxu0 0.0
    %1077 = vmatprep.subr.mxu0 0.0
    %1078 = vmatpush1.msra.mxu0 0.0
    %1079 = vmatprep.subr.mxu0 0.0
    %1080 = vmatpush1.msra.mxu0 0.0
    %1081 = vmatprep.subr.mxu0 0.0
    %1082 = vmatpush1.msra.mxu0 0.0
    %1083 = vmatprep.subr.mxu0 0.0
    %1084 = vmatpush1.msra.mxu0 0.0
    %1085 = vmatprep.subr.mxu0 0.0
    %1086 = vmatpush1.msra.mxu0 0.0
    %1087 = vmatprep.subr.mxu0 0.0
    %1088 = vmatpush1.msra.mxu0 0.0
    %1089 = vmatprep.subr.mxu0 0.0
    %1090 = vmatpush1.msra.mxu0 0.0
    %1091 = vmatprep.subr.mxu0 0.0
    %1092 = vmatpush1.msra.mxu0 0.0
    %1093 = vmatprep.subr.mxu0 0.0
    %1094 = vmatpush1.msra.mxu0 0.0
    %1095 = vmatprep.subr.mxu0 0.0
    %1096 = vmatpush1.msra.mxu0 0.0
    %1097 = vmatprep.subr.mxu0 0.0
    %1098 = vmatpush1.msra.mxu0 0.0
    %1099 = vmatprep.subr.mxu0 0.0
    %1100 = vmatpush1.msra.mxu0 0.0
    %1101 = vmatprep.subr.mxu0 0.0
    %1102 = vmatpush1.msra.mxu0 0.0
    %1103 = vmatprep.subr.mxu0 0.0
    %1104 = vmatpush1.msra.mxu0 0.0
    %1105 = vmatprep.subr.mxu0 0.0
    %1106 = vmatpush1.msra.mxu0 0.0
    %1107 = vmatprep.mubr.f32.mxu0 0.0
    %1108 = vmatmul.mubr.f32.gmra.mrb[0].mxu0 %v1041
    %v1109 = vpop.f32.mrb[0].mxu0
    %v1110 = vadd.f32 0.0, %v1109
    %v1111 = vpop.f32.mrb[0].mxu0
    %1112 = vdwg.mxu0
    %v1113 = vadd.f32 %v171, %v1110
    %v1114 = vxor.u32 %v1113, 2147483648
    %v1115 = vmul.f32 %v1114, 1.442695
    %v1116 = vpow.pop %v1115
    %v1117 = vadd.f32 %v1116, 1.0
    %v1118 = vrcp.pop %v1117
    %v1119 = vmul.f32 1.0, %v1118
    %v1120 = vtanh.pop %v1113
    %1122 = vrot.lane.b32.xlu0 %v1034, 32
    %v1123 = vpop.permute.xlu0 %1122
    %v1125 = vmul.f32 %v1119, %v1123
    %1127 = vrot.lane.b32.xlu0 %v1120, 32
    %v1128 = vpop.permute.xlu0 %1127
    %v1130 = vmul.f32 %v1119, %v1128
    %1132 = vrot.lane.b32.xlu0 %v1130, 32
    %v1133 = vpop.permute.xlu0 %1132
    %v1135 = vadd.f32 %v1125, %v1133
    %v1136 = vtanh.pop %v1135
    %1138 = vrot.lane.b32.xlu0 %v1136, 32
    %v1139 = vpop.permute.xlu0 %1138
    %v1141 = vmul.f32 %v1119, %v1139
    %v1142 = vld [vmem:[%s1 + $0x38] sm:$0xff]
    %1144 = vrot.lane.b32.xlu0 %v1141, 64
    %v1145 = vpop.permute.xlu0 %1144
    %v1147 = vmul.f32 %v1142, %v1145
    %v1148 = vld [vmem:[%s5] sm:$0xff]
    %v1149 = vld [vmem:[%s5 + $0x8] sm:$0xff]
    %v1150 = vld [vmem:[%s5 + $0x10] sm:$0xff]
    %v1151 = vld [vmem:[%s5 + $0x18] sm:$0xff]
    %v1152 = vld [vmem:[%s6] sm:$0x1]
    %v1154 = vlaneseq
    %v1155 = vshrl.u32 %v1154, 7
    %v1156 = vsub.s32 0, %v1155
    %v1157 = vrot.slane %v1152, %v1156
    %v1160 = vsel %vm178, %v282, 0
    %v1163 = vsel %vm178, %v414, 0
    %v1166 = vsel %vm178, %v539, 0
    %v1169 = vsel %vm178, %v664, 0
    %v1172 = vsel %vm178, %v789, 0
    %v1175 = vsel %vm178, %v914, 0
    %v1178 = vsel %vm178, %v1039, 0
    %v1181 = vsel %vm178, %v1147, 0
    %1183 = vmatprep.subr.mxu0 0.0
    %1184 = vmatpush1.msra.mxu0 %v1148
    %1185 = vmatprep.subr.mxu0 0.0
    %1186 = vmatpush1.msra.mxu0 %v1149
    %1187 = vmatprep.subr.mxu0 0.0
    %1188 = vmatpush1.msra.mxu0 %v1150
    %1189 = vmatprep.subr.mxu0 0.0
    %1190 = vmatpush1.msra.mxu0 %v1151
    %1191 = vmatprep.subr.mxu0 0.0
    %1192 = vmatpush1.msra.mxu0 0.0
    %1193 = vmatprep.subr.mxu0 0.0
    %1194 = vmatpush1.msra.mxu0 0.0
    %1195 = vmatprep.subr.mxu0 0.0
    %1196 = vmatpush1.msra.mxu0 0.0
    %1197 = vmatprep.subr.mxu0 0.0
    %1198 = vmatpush1.msra.mxu0 0.0
    %1199 = vmatprep.subr.mxu0 0.0
    %1200 = vmatpush1.msra.mxu0 0.0
    %1201 = vmatprep.subr.mxu0 0.0
    %1202 = vmatpush1.msra.mxu0 0.0
    %1203 = vmatprep.subr.mxu0 0.0
    %1204 = vmatpush1.msra.mxu0 0.0
    %1205 = vmatprep.subr.mxu0 0.0
    %1206 = vmatpush1.msra.mxu0 0.0
    %1207 = vmatprep.subr.mxu0 0.0
    %1208 = vmatpush1.msra.mxu0 0.0
    %1209 = vmatprep.subr.mxu0 0.0
    %1210 = vmatpush1.msra.mxu0 0.0
    %1211 = vmatprep.subr.mxu0 0.0
    %1212 = vmatpush1.msra.mxu0 0.0
    %1213 = vmatprep.subr.mxu0 0.0
    %1214 = vmatpush1.msra.mxu0 0.0
    %1215 = vmatprep.subr.mxu0 0.0
    %1216 = vmatpush1.msra.mxu0 0.0
    %1217 = vmatprep.subr.mxu0 0.0
    %1218 = vmatpush1.msra.mxu0 0.0
    %1219 = vmatprep.subr.mxu0 0.0
    %1220 = vmatpush1.msra.mxu0 0.0
    %1221 = vmatprep.subr.mxu0 0.0
    %1222 = vmatpush1.msra.mxu0 0.0
    %1223 = vmatprep.subr.mxu0 0.0
    %1224 = vmatpush1.msra.mxu0 0.0
    %1225 = vmatprep.subr.mxu0 0.0
    %1226 = vmatpush1.msra.mxu0 0.0
    %1227 = vmatprep.subr.mxu0 0.0
    %1228 = vmatpush1.msra.mxu0 0.0
    %1229 = vmatprep.subr.mxu0 0.0
    %1230 = vmatpush1.msra.mxu0 0.0
    %1231 = vmatprep.subr.mxu0 0.0
    %1232 = vmatpush1.msra.mxu0 0.0
    %1233 = vmatprep.subr.mxu0 0.0
    %1234 = vmatpush1.msra.mxu0 0.0
    %1235 = vmatprep.subr.mxu0 0.0
    %1236 = vmatpush1.msra.mxu0 0.0
    %1237 = vmatprep.subr.mxu0 0.0
    %1238 = vmatpush1.msra.mxu0 0.0
    %1239 = vmatprep.subr.mxu0 0.0
    %1240 = vmatpush1.msra.mxu0 0.0
    %1241 = vmatprep.subr.mxu0 0.0
    %1242 = vmatpush1.msra.mxu0 0.0
    %1243 = vmatprep.subr.mxu0 0.0
    %1244 = vmatpush1.msra.mxu0 0.0
    %1245 = vmatprep.subr.mxu0 0.0
    %1246 = vmatpush1.msra.mxu0 0.0
    %1247 = vmatprep.mubr.f32.mxu0 0.0
    %1248 = vmatmul.mubr.f32.gmra.mrb[0].mxu0 %v1160
    %v1249 = vpop.f32.mrb[0].mxu0
    %v1250 = vadd.f32 %v1157, %v1249
    %v1251 = vpop.f32.mrb[0].mxu0
    %1252 = vmatprep.mubr.f32.mxu0 0.0
    %1253 = vmatmul.mubr.f32.gmra.mrb[0].mxu0 %v1163
    %v1254 = vpop.f32.mrb[0].mxu0
    %v1255 = vadd.f32 %v1157, %v1254
    %v1256 = vpop.f32.mrb[0].mxu0
    %1257 = vmatprep.mubr.f32.mxu0 0.0
    %1258 = vmatmul.mubr.f32.gmra.mrb[0].mxu0 %v1166
    %v1259 = vpop.f32.mrb[0].mxu0
    %v1260 = vadd.f32 %v1157, %v1259
    %v1261 = vpop.f32.mrb[0].mxu0
    %1262 = vmatprep.mubr.f32.mxu0 0.0
    %1263 = vmatmul.mubr.f32.gmra.mrb[0].mxu0 %v1169
    %v1264 = vpop.f32.mrb[0].mxu0
    %v1265 = vadd.f32 %v1157, %v1264
    %v1266 = vpop.f32.mrb[0].mxu0
    %1267 = vmatprep.mubr.f32.mxu0 0.0
    %1268 = vmatmul.mubr.f32.gmra.mrb[0].mxu0 %v1172
    %v1269 = vpop.f32.mrb[0].mxu0
    %v1270 = vadd.f32 %v1157, %v1269
    %v1271 = vpop.f32.mrb[0].mxu0
    %1272 = vmatprep.mubr.f32.mxu0 0.0
    %1273 = vmatmul.mubr.f32.gmra.mrb[0].mxu0 %v1175
    %v1274 = vpop.f32.mrb[0].mxu0
    %v1275 = vadd.f32 %v1157, %v1274
    %v1276 = vpop.f32.mrb[0].mxu0
    %1277 = vmatprep.mubr.f32.mxu0 0.0
    %1278 = vmatmul.mubr.f32.gmra.mrb[0].mxu0 %v1178
    %v1279 = vpop.f32.mrb[0].mxu0
    %v1280 = vadd.f32 %v1157, %v1279
    %v1281 = vpop.f32.mrb[0].mxu0
    %1282 = vmatprep.mubr.f32.mxu0 0.0
    %1283 = vmatmul.mubr.f32.gmra.mrb[0].mxu0 %v1181
    %v1284 = vpop.f32.mrb[0].mxu0
    %v1285 = vadd.f32 %v1157, %v1284
    %v1286 = vpop.f32.mrb[0].mxu0
    %1287 = vdwg.mxu0
    %1288 = vmax.xlane.f32.xlu0 %v1250
    %v1289 = vpop.xlane.xlu0 %1288
    %1290 = vmax.xlane.f32.xlu0 %v1255
    %v1291 = vpop.xlane.xlu0 %1290
    %1292 = vmax.xlane.f32.xlu0 %v1260
    %v1293 = vpop.xlane.xlu0 %1292
    %1294 = vmax.xlane.f32.xlu0 %v1265
    %v1295 = vpop.xlane.xlu0 %1294
    %1296 = vmax.xlane.f32.xlu0 %v1270
    %v1297 = vpop.xlane.xlu0 %1296
    %1298 = vmax.xlane.f32.xlu0 %v1275
    %v1299 = vpop.xlane.xlu0 %1298
    %1300 = vmax.xlane.f32.xlu0 %v1280
    %v1301 = vpop.xlane.xlu0 %1300
    %1302 = vmax.xlane.f32.xlu0 %v1285
    %v1303 = vpop.xlane.xlu0 %1302
    %v1304 = vsub.f32 %v1250, %v1289
    %v1305 = vsub.f32 %v1255, %v1291
    %v1306 = vsub.f32 %v1260, %v1293
    %v1307 = vsub.f32 %v1265, %v1295
    %v1308 = vsub.f32 %v1270, %v1297
    %v1309 = vsub.f32 %v1275, %v1299
    %v1310 = vsub.f32 %v1280, %v1301
    %v1311 = vsub.f32 %v1285, %v1303
    %v1312 = vmul.f32 %v1304, 1.442695
    %v1313 = vpow.pop %v1312
    %v1314 = vmul.f32 %v1305, 1.442695
    %v1315 = vpow.pop %v1314
    %v1316 = vmul.f32 %v1306, 1.442695
    %v1317 = vpow.pop %v1316
    %v1318 = vmul.f32 %v1307, 1.442695
    %v1319 = vpow.pop %v1318
    %v1320 = vmul.f32 %v1308, 1.442695
    %v1321 = vpow.pop %v1320
    %v1322 = vmul.f32 %v1309, 1.442695
    %v1323 = vpow.pop %v1322
    %v1324 = vmul.f32 %v1310, 1.442695
    %v1325 = vpow.pop %v1324
    %v1326 = vmul.f32 %v1311, 1.442695
    %v1327 = vpow.pop %v1326
    %1328 = vadd.xlane.f32.xlu0 %v1313
    %v1329 = vpop.xlane.xlu0 %1328
    %1330 = vadd.xlane.f32.xlu0 %v1315
    %v1331 = vpop.xlane.xlu0 %1330
    %1332 = vadd.xlane.f32.xlu0 %v1317
    %v1333 = vpop.xlane.xlu0 %1332
    %1334 = vadd.xlane.f32.xlu0 %v1319
    %v1335 = vpop.xlane.xlu0 %1334
    %1336 = vadd.xlane.f32.xlu0 %v1321
    %v1337 = vpop.xlane.xlu0 %1336
    %1338 = vadd.xlane.f32.xlu0 %v1323
    %v1339 = vpop.xlane.xlu0 %1338
    %1340 = vadd.xlane.f32.xlu0 %v1325
    %v1341 = vpop.xlane.xlu0 %1340
    %1342 = vadd.xlane.f32.xlu0 %v1327
    %v1343 = vpop.xlane.xlu0 %1342
    %v1344 = vlog2.pop %v1329
    %v1345 = vmul.f32 %v1344, 0.6931472
    %v1346 = vlog2.pop %v1331
    %v1347 = vmul.f32 %v1346, 0.6931472
    %v1348 = vlog2.pop %v1333
    %v1349 = vmul.f32 %v1348, 0.6931472
    %v1350 = vlog2.pop %v1335
    %v1351 = vmul.f32 %v1350, 0.6931472
    %v1352 = vlog2.pop %v1337
    %v1353 = vmul.f32 %v1352, 0.6931472
    %v1354 = vlog2.pop %v1339
    %v1355 = vmul.f32 %v1354, 0.6931472
    %v1356 = vlog2.pop %v1341
    %v1357 = vmul.f32 %v1356, 0.6931472
    %v1358 = vlog2.pop %v1343
    %v1359 = vmul.f32 %v1358, 0.6931472
    %v1360 = vadd.f32 %v1289, %v1345
    %v1361 = vadd.f32 %v1291, %v1347
    %v1362 = vadd.f32 %v1293, %v1349
    %v1363 = vadd.f32 %v1295, %v1351
    %v1364 = vadd.f32 %v1297, %v1353
    %v1365 = vadd.f32 %v1299, %v1355
    %v1366 = vadd.f32 %v1301, %v1357
    %v1367 = vadd.f32 %v1303, %v1359
    %v1368 = vsub.f32 %v1250, %v1360
    %v1369 = vsub.f32 %v1255, %v1361
    %v1370 = vsub.f32 %v1260, %v1362
    %v1371 = vsub.f32 %v1265, %v1363
    %v1372 = vsub.f32 %v1270, %v1364
    %v1373 = vsub.f32 %v1275, %v1365
    %v1374 = vsub.f32 %v1280, %v1366
    %v1375 = vsub.f32 %v1285, %v1367
    %1376 = vst [vmem:[#allocation2] sm:$0xff] %v1368
    %1377 = vst [vmem:[#allocation2 + $0x8] sm:$0xff] %v1369
    %1378 = vst [vmem:[#allocation2 + $0x10] sm:$0xff] %v1370
    %1379 = vst [vmem:[#allocation2 + $0x18] sm:$0xff] %v1371
    %1380 = vst [vmem:[#allocation2 + $0x20] sm:$0xff] %v1372
    %1381 = vst [vmem:[#allocation2 + $0x28] sm:$0xff] %v1373
    %1382 = vst [vmem:[#allocation2 + $0x30] sm:$0xff] %v1374
    %1383 = vst [vmem:[#allocation2 + $0x38] sm:$0xff] %v1375
    // Predicated region
    $region30: #{tpu_custom_call.1} parent=1 // pred_check
      _
    $region31: #{tpu_custom_call.1} parent=1 // pred_check_branch
      %1385 = sbr.rel (0) target = $region33
    $region32: #{tpu_custom_call.1} parent=1 // pred_region
      %s1387 = ssub.s32 1024, 1024
      %1388 = vsyncadd [#allocation3], %s1387
      %s1389 = sshll.u32 [#allocation2], 4
      %s1390 = int_to_ptr.vmem [resolvable:$true] %s1389
      %1395 = dma.vmem_to_hbm [thread:$0]  %s1390, 1024, %s7, [#allocation3], 128, 128, 8
    $region33: #{tpu_custom_call.1} parent=1 // pred_fallthru
      _
    // Predicated region
    $region34: #{tpu_custom_call.1} parent=1 // pred_check
      _
    $region35: #{tpu_custom_call.1} parent=1 // pred_check_branch
      %1397 = sbr.rel (0) target = $region37
    $region36: #{tpu_custom_call.1} parent=1 // pred_region
      %1398 = dma.done [#allocation3], 1024
    $region37: #{tpu_custom_call.1} parent=1 // pred_fallthru
      _
    %1399 = vsyncpa [#allocation3], 1

</llo_original>
